<compile_context>
chip_gen: v6e
topology: v6e:2x2x1
jax: 0.10.0
libtpu: 0.0.40
codegen_flags: <defaults>
</compile_context>

<pallas_src>
import jax
import jax.numpy as jnp
from jax.experimental import pallas as pl
from jax.experimental.pallas import tpu as pltpu


def _rnn_kernel(x_ref, wih_ref, whh_ref, bh_ref, wout_ref, bout_ref, y_ref):
    # x_ref:    (S, Bblk, P)   input block (possibly bf16)
    # wih_ref:  (P, H)         input-to-hidden weights (possibly bf16)
    # whh_ref:  (H, H)         hidden-to-hidden weights (f32)
    # bh_ref:   (1, H)         hidden bias (f32)
    # wout_ref: (H, P)         readout weights (possibly bf16)
    # bout_ref: (1, P)         readout bias (f32)
    # y_ref:    (S, Bblk, P)   output block (f32)
    S, Bblk, _ = x_ref.shape
    H = whh_ref.shape[0]

    # Hoisted weight/bias loads -- reused every step, VMEM resident.
    w_ih = wih_ref[...]
    w_hh = whh_ref[...]
    w_out = wout_ref[...]
    b_h = bh_ref[...]
    b_out = bout_ref[...]

    def step(t, h):
        x_t = x_ref[t]  # (Bblk, P) dynamic first-axis load
        # Pre-activation: input projection + recurrence + bias, accumulated f32.
        pre = (jnp.dot(x_t, w_ih, preferred_element_type=jnp.float32)
               + jnp.dot(h, w_hh, preferred_element_type=jnp.float32)
               + b_h)
        h_new = jnp.tanh(pre)  # EUP; carried state stays f32
        # Per-step readout (hidden under the serial chain); store straight into
        # the VMEM-resident output block -- HBM writeback happens once at the
        # end of the grid iteration.
        y_t = (jnp.dot(h_new.astype(w_out.dtype), w_out,
                       preferred_element_type=jnp.float32)
               + b_out)
        y_ref[t] = y_t.astype(y_ref.dtype)
        return h_new

    # Bounded unroll: overlap of step t+1's MXU pushes with step t's tanh,
    # without full-unroll instruction/vreg blowup at long S.
    jax.lax.fori_loop(0, S, step, jnp.zeros((Bblk, H), jnp.float32),
                      unroll=min(int(S), 8))


def rnn_forward(x, w_ih, w_hh, b_h, w_out, b_out, *,
                mxu_dtype=jnp.float32, num_batch_blocks=1):
    """x: (S, B, P) time-major.  Returns y: (S, B, P) float32.

    mxu_dtype:        dtype fed to the MXU for x / W_ih / W_out (bf16 on
                      v6e/v7x for full-rate matmuls); W_hh, biases and the
                      carried hidden state always stay float32.
    num_batch_blocks: parallel grid blocks over the batch dim (use 2 on v7x to
                      occupy both TensorCores; 1 on v5e/v6e).
    """
    S, B, P = x.shape
    H = w_hh.shape[0]
    assert B % num_batch_blocks == 0, "batch must divide num_batch_blocks"
    Bblk = B // num_batch_blocks
    assert Bblk % 8 == 0 or Bblk == B, "batch block must be sublane (8) aligned"

    # Dtype policy: MXU operands that do not feed the recurrence carry may be
    # narrowed; everything on the VPU/EUP path stays f32.
    x_c = x.astype(mxu_dtype)
    w_ih_c = w_ih.astype(mxu_dtype)
    w_out_c = w_out.astype(mxu_dtype)
    w_hh_c = w_hh.astype(jnp.float32)
    b_h_c = b_h.astype(jnp.float32)
    b_out_c = b_out.astype(jnp.float32)

    itemsize = jnp.dtype(mxu_dtype).itemsize
    flops = 2 * S * B * (P * H + H * H + H * P)
    bytes_accessed = (S * B * P * itemsize            # x in
                      + S * B * P * 4                 # y out
                      + (P * H + H * P) * itemsize    # bf16-able weights
                      + (H * H + H + P) * 4)          # f32 weights/biases
    cost = pl.CostEstimate(flops=flops, transcendentals=S * B * H,
                           bytes_accessed=bytes_accessed)

    # VMEM budget: double-buffered in/out blocks + resident weights, generous
    # headroom, floored at 16 MiB so Mosaic internal scratch is never starved.
    blk_bytes = S * Bblk * P * (itemsize + 4)
    w_bytes = (P * H + H * P) * itemsize + (H * H + H + P) * 4
    resident = 2 * (blk_bytes + w_bytes)
    vmem_limit = int(min(max(4 * resident, 16 << 20), 64 << 20))

    y = pl.pallas_call(
        _rnn_kernel,
        out_shape=jax.ShapeDtypeStruct((S, B, P), jnp.float32),
        grid=(num_batch_blocks,),
        in_specs=[
            pl.BlockSpec((S, Bblk, P), lambda i: (0, i, 0)),  # x (batch-blocked)
            pl.BlockSpec((P, H), lambda i: (0, 0)),           # W_ih
            pl.BlockSpec((H, H), lambda i: (0, 0)),           # W_hh
            pl.BlockSpec((1, H), lambda i: (0, 0)),           # b_h
            pl.BlockSpec((H, P), lambda i: (0, 0)),           # W_out
            pl.BlockSpec((1, P), lambda i: (0, 0)),           # b_out
        ],
        out_specs=pl.BlockSpec((S, Bblk, P), lambda i: (0, i, 0)),
        compiler_params=pltpu.CompilerParams(
            dimension_semantics=("parallel",),
            vmem_limit_bytes=vmem_limit),
        cost_estimate=cost,
    )(x_c, w_ih_c, w_hh_c, b_h_c, w_out_c, b_out_c)

    return y


def rnn_reference(x, w_ih, w_hh, b_h, w_out, b_out, *, mxu_dtype=jnp.float32):
    """Pure-JAX reference (lax.scan) mirroring the kernel's dtype policy."""
    xq = x.astype(mxu_dtype).astype(jnp.float32)
    wihq = w_ih.astype(mxu_dtype).astype(jnp.float32)
    woutq = w_out.astype(mxu_dtype).astype(jnp.float32)
    w_hh32 = w_hh.astype(jnp.float32)
    b_h32 = b_h.astype(jnp.float32)
    b_out32 = b_out.astype(jnp.float32)
    H = w_hh.shape[0]
    B = x.shape[1]

    def step(h, x_t):
        h_new = jnp.tanh(x_t @ wihq + h @ w_hh32 + b_h32)
        hq = h_new.astype(mxu_dtype).astype(jnp.float32)
        y_t = hq @ woutq + b_out32
        return h_new, y_t

    h0 = jnp.zeros((B, H), jnp.float32)
    _, ys = jax.lax.scan(step, h0, xq)
    return ys


if __name__ == "__main__":
    # Small shapes consistent with the module: pose_size from config, a short
    # motion sequence, small batch / hidden size.
    SEQ, BATCH, POSE_SIZE, HIDDEN = 8, 16, 16, 32

    key = jax.random.PRNGKey(0)
    kx, k1, k2, k3, k4, k5 = jax.random.split(key, 6)

    x = jax.random.normal(kx, (SEQ, BATCH, POSE_SIZE), jnp.float32)

    # Deterministic parameter init (synthetic weights, no checkpoint load).
    w_ih = jax.random.normal(k1, (POSE_SIZE, HIDDEN), jnp.float32) * 0.1
    w_hh = jax.random.normal(k2, (HIDDEN, HIDDEN), jnp.float32) * 0.1
    b_h = jax.random.normal(k3, (1, HIDDEN), jnp.float32) * 0.1
    w_out = jax.random.normal(k4, (HIDDEN, POSE_SIZE), jnp.float32) * 0.1
    b_out = jax.random.normal(k5, (1, POSE_SIZE), jnp.float32) * 0.1

    # 1) f32 path, single batch block (v5e/v6e style).
    y_f32 = jax.block_until_ready(
        rnn_forward(x, w_ih, w_hh, b_h, w_out, b_out, num_batch_blocks=1))

    # 2) f32 path, 2-way parallel batch grid (v7x: one block per TensorCore).
    y_f32_2tc = jax.block_until_ready(
        rnn_forward(x, w_ih, w_hh, b_h, w_out, b_out, num_batch_blocks=2))

    # 3) bf16-MXU path (x / W_ih / W_out bf16; W_hh, biases, h stay f32).
    y_bf16 = jax.block_until_ready(
        rnn_forward(x, w_ih, w_hh, b_h, w_out, b_out,
                    mxu_dtype=jnp.bfloat16, num_batch_blocks=2))

    ref_f32 = jax.block_until_ready(
        rnn_reference(x, w_ih, w_hh, b_h, w_out, b_out))
    ref_bf16 = jax.block_until_ready(
        rnn_reference(x, w_ih, w_hh, b_h, w_out, b_out,
                      mxu_dtype=jnp.bfloat16))

    assert y_f32.shape == (SEQ, BATCH, POSE_SIZE)
    assert jnp.allclose(y_f32, ref_f32, atol=1e-5, rtol=1e-5), "f32 mismatch"
    assert jnp.allclose(y_f32_2tc, ref_f32, atol=1e-5, rtol=1e-5), \
        "f32 (parallel grid) mismatch"
    assert jnp.allclose(y_bf16, ref_bf16, atol=2e-3, rtol=2e-3), "bf16 mismatch"

    print("KERNEL_OK")
</pallas_src>

<mosaic_0001>
module attributes {stable_mosaic.version = 11 : i64} {
  func.func @_rnn_kernel(%arg0: i32, %arg1: memref<8x16x16xf32, #tpu.memory_space<vmem>>, %arg2: memref<16x32xf32, #tpu.memory_space<vmem>>, %arg3: memref<32x32xf32, #tpu.memory_space<vmem>>, %arg4: memref<1x32xf32, #tpu.memory_space<vmem>>, %arg5: memref<32x16xf32, #tpu.memory_space<vmem>>, %arg6: memref<1x16xf32, #tpu.memory_space<vmem>>, %arg7: memref<8x16x16xf32, #tpu.memory_space<vmem>>) attributes {dimension_semantics = [#tpu.dimension_semantics<parallel>], iteration_bounds = array<i64: 1>, scalar_prefetch = 0 : i64, scratch_operands = 0 : i64, tpu.core_type = #tpu.core_type<tc>, window_params = [{transform_indices = @transform_0, window_bounds = array<i64: 8, 16, 16>}, {pipeline_mode = #tpu.pipeline_mode<synchronous>, transform_indices = @transform_1, window_bounds = array<i64: 16, 32>}, {pipeline_mode = #tpu.pipeline_mode<synchronous>, transform_indices = @transform_2, window_bounds = array<i64: 32, 32>}, {pipeline_mode = #tpu.pipeline_mode<synchronous>, transform_indices = @transform_3, window_bounds = array<i64: 1, 32>}, {pipeline_mode = #tpu.pipeline_mode<synchronous>, transform_indices = @transform_4, window_bounds = array<i64: 32, 16>}, {pipeline_mode = #tpu.pipeline_mode<synchronous>, transform_indices = @transform_5, window_bounds = array<i64: 1, 16>}, {transform_indices = @transform_6, window_bounds = array<i64: 8, 16, 16>}]} {
    %c0 = arith.constant 0 : index
    %c0_0 = arith.constant 0 : index
    %0 = vector.load %arg2[%c0, %c0_0] : memref<16x32xf32, #tpu.memory_space<vmem>>, vector<16x32xf32>
    %c0_1 = arith.constant 0 : index
    %c0_2 = arith.constant 0 : index
    %1 = vector.load %arg3[%c0_1, %c0_2] : memref<32x32xf32, #tpu.memory_space<vmem>>, vector<32x32xf32>
    %c0_3 = arith.constant 0 : index
    %c0_4 = arith.constant 0 : index
    %2 = vector.load %arg5[%c0_3, %c0_4] : memref<32x16xf32, #tpu.memory_space<vmem>>, vector<32x16xf32>
    %c0_5 = arith.constant 0 : index
    %c0_6 = arith.constant 0 : index
    %3 = vector.load %arg4[%c0_5, %c0_6] : memref<1x32xf32, #tpu.memory_space<vmem>>, vector<1x32xf32>
    %c0_7 = arith.constant 0 : index
    %c0_8 = arith.constant 0 : index
    %4 = vector.load %arg6[%c0_7, %c0_8] : memref<1x16xf32, #tpu.memory_space<vmem>>, vector<1x16xf32>
    %cst = arith.constant 0.000000e+00 : f32
    %5 = vector.broadcast %cst : f32 to vector<16x32xf32>
    %c0_i32 = arith.constant 0 : i32
    %6 = arith.index_cast %c0_i32 : i32 to index
    %c0_9 = arith.constant 0 : index
    %c0_10 = arith.constant 0 : index
    %7 = vector.load %arg1[%6, %c0_9, %c0_10] : memref<8x16x16xf32, #tpu.memory_space<vmem>>, vector<1x16x16xf32>
    %8 = vector.shape_cast %7 : vector<1x16x16xf32> to vector<16x16xf32>
    %cst_11 = arith.constant dense<0.000000e+00> : vector<16x32xf32>
    %9 = tpu.matmul %8, %0, %cst_11 {dimension_numbers = #tpu.dot_dimension_numbers<[1], [0], [0], [1], [0, 0, 1, 1], [], []>} : vector<16x16xf32>, vector<16x32xf32>, vector<16x32xf32> -> vector<16x32xf32>
    %cst_12 = arith.constant dense<0.000000e+00> : vector<16x32xf32>
    %10 = tpu.matmul %5, %1, %cst_12 {dimension_numbers = #tpu.dot_dimension_numbers<[1], [0], [0], [1], [0, 0, 1, 1], [], []>} : vector<16x32xf32>, vector<32x32xf32>, vector<16x32xf32> -> vector<16x32xf32>
    %11 = arith.addf %9, %10 : vector<16x32xf32>
    %12 = vector.broadcast %3 : vector<1x32xf32> to vector<16x32xf32>
    %13 = arith.addf %11, %12 : vector<16x32xf32>
    %14 = math.tanh %13 : vector<16x32xf32>
    %cst_13 = arith.constant dense<0.000000e+00> : vector<16x16xf32>
    %15 = tpu.matmul %14, %2, %cst_13 {dimension_numbers = #tpu.dot_dimension_numbers<[1], [0], [0], [1], [0, 0, 1, 1], [], []>} : vector<16x32xf32>, vector<32x16xf32>, vector<16x16xf32> -> vector<16x16xf32>
    %16 = vector.broadcast %4 : vector<1x16xf32> to vector<16x16xf32>
    %17 = arith.addf %15, %16 : vector<16x16xf32>
    %18 = arith.index_cast %c0_i32 : i32 to index
    %c0_14 = arith.constant 0 : index
    %c0_15 = arith.constant 0 : index
    %19 = vector.load %arg7[%18, %c0_14, %c0_15] : memref<8x16x16xf32, #tpu.memory_space<vmem>>, vector<1x16x16xf32>
    %20 = vector.shape_cast %19 : vector<1x16x16xf32> to vector<16x16xf32>
    %21 = vector.shape_cast %17 : vector<16x16xf32> to vector<1x16x16xf32>
    tpu.vector_store %arg7[%18, %c0_14, %c0_15], %21 {strides = array<i32>} : memref<8x16x16xf32, #tpu.memory_space<vmem>>, vector<1x16x16xf32>,
    %c1_i32 = arith.constant 1 : i32
    %22 = arith.index_cast %c1_i32 : i32 to index
    %c0_16 = arith.constant 0 : index
    %c0_17 = arith.constant 0 : index
    %23 = vector.load %arg1[%22, %c0_16, %c0_17] : memref<8x16x16xf32, #tpu.memory_space<vmem>>, vector<1x16x16xf32>
    %24 = vector.shape_cast %23 : vector<1x16x16xf32> to vector<16x16xf32>
    %cst_18 = arith.constant dense<0.000000e+00> : vector<16x32xf32>
    %25 = tpu.matmul %24, %0, %cst_18 {dimension_numbers = #tpu.dot_dimension_numbers<[1], [0], [0], [1], [0, 0, 1, 1], [], []>} : vector<16x16xf32>, vector<16x32xf32>, vector<16x32xf32> -> vector<16x32xf32>
    %cst_19 = arith.constant dense<0.000000e+00> : vector<16x32xf32>
    %26 = tpu.matmul %14, %1, %cst_19 {dimension_numbers = #tpu.dot_dimension_numbers<[1], [0], [0], [1], [0, 0, 1, 1], [], []>} : vector<16x32xf32>, vector<32x32xf32>, vector<16x32xf32> -> vector<16x32xf32>
    %27 = arith.addf %25, %26 : vector<16x32xf32>
    %28 = vector.broadcast %3 : vector<1x32xf32> to vector<16x32xf32>
    %29 = arith.addf %27, %28 : vector<16x32xf32>
    %30 = math.tanh %29 : vector<16x32xf32>
    %cst_20 = arith.constant dense<0.000000e+00> : vector<16x16xf32>
    %31 = tpu.matmul %30, %2, %cst_20 {dimension_numbers = #tpu.dot_dimension_numbers<[1], [0], [0], [1], [0, 0, 1, 1], [], []>} : vector<16x32xf32>, vector<32x16xf32>, vector<16x16xf32> -> vector<16x16xf32>
    %32 = vector.broadcast %4 : vector<1x16xf32> to vector<16x16xf32>
    %33 = arith.addf %31, %32 : vector<16x16xf32>
    %34 = arith.index_cast %c1_i32 : i32 to index
    %c0_21 = arith.constant 0 : index
    %c0_22 = arith.constant 0 : index
    %35 = vector.load %arg7[%34, %c0_21, %c0_22] : memref<8x16x16xf32, #tpu.memory_space<vmem>>, vector<1x16x16xf32>
    %36 = vector.shape_cast %35 : vector<1x16x16xf32> to vector<16x16xf32>
    %37 = vector.shape_cast %33 : vector<16x16xf32> to vector<1x16x16xf32>
    tpu.vector_store %arg7[%34, %c0_21, %c0_22], %37 {strides = array<i32>} : memref<8x16x16xf32, #tpu.memory_space<vmem>>, vector<1x16x16xf32>,
    %c2_i32 = arith.constant 2 : i32
    %38 = arith.index_cast %c2_i32 : i32 to index
    %c0_23 = arith.constant 0 : index
    %c0_24 = arith.constant 0 : index
    %39 = vector.load %arg1[%38, %c0_23, %c0_24] : memref<8x16x16xf32, #tpu.memory_space<vmem>>, vector<1x16x16xf32>
    %40 = vector.shape_cast %39 : vector<1x16x16xf32> to vector<16x16xf32>
    %cst_25 = arith.constant dense<0.000000e+00> : vector<16x32xf32>
    %41 = tpu.matmul %40, %0, %cst_25 {dimension_numbers = #tpu.dot_dimension_numbers<[1], [0], [0], [1], [0, 0, 1, 1], [], []>} : vector<16x16xf32>, vector<16x32xf32>, vector<16x32xf32> -> vector<16x32xf32>
    %cst_26 = arith.constant dense<0.000000e+00> : vector<16x32xf32>
    %42 = tpu.matmul %30, %1, %cst_26 {dimension_numbers = #tpu.dot_dimension_numbers<[1], [0], [0], [1], [0, 0, 1, 1], [], []>} : vector<16x32xf32>, vector<32x32xf32>, vector<16x32xf32> -> vector<16x32xf32>
    %43 = arith.addf %41, %42 : vector<16x32xf32>
    %44 = vector.broadcast %3 : vector<1x32xf32> to vector<16x32xf32>
    %45 = arith.addf %43, %44 : vector<16x32xf32>
    %46 = math.tanh %45 : vector<16x32xf32>
    %cst_27 = arith.constant dense<0.000000e+00> : vector<16x16xf32>
    %47 = tpu.matmul %46, %2, %cst_27 {dimension_numbers = #tpu.dot_dimension_numbers<[1], [0], [0], [1], [0, 0, 1, 1], [], []>} : vector<16x32xf32>, vector<32x16xf32>, vector<16x16xf32> -> vector<16x16xf32>
    %48 = vector.broadcast %4 : vector<1x16xf32> to vector<16x16xf32>
    %49 = arith.addf %47, %48 : vector<16x16xf32>
    %50 = arith.index_cast %c2_i32 : i32 to index
    %c0_28 = arith.constant 0 : index
    %c0_29 = arith.constant 0 : index
    %51 = vector.load %arg7[%50, %c0_28, %c0_29] : memref<8x16x16xf32, #tpu.memory_space<vmem>>, vector<1x16x16xf32>
    %52 = vector.shape_cast %51 : vector<1x16x16xf32> to vector<16x16xf32>
    %53 = vector.shape_cast %49 : vector<16x16xf32> to vector<1x16x16xf32>
    tpu.vector_store %arg7[%50, %c0_28, %c0_29], %53 {strides = array<i32>} : memref<8x16x16xf32, #tpu.memory_space<vmem>>, vector<1x16x16xf32>,
    %c3_i32 = arith.constant 3 : i32
    %54 = arith.index_cast %c3_i32 : i32 to index
    %c0_30 = arith.constant 0 : index
    %c0_31 = arith.constant 0 : index
    %55 = vector.load %arg1[%54, %c0_30, %c0_31] : memref<8x16x16xf32, #tpu.memory_space<vmem>>, vector<1x16x16xf32>
    %56 = vector.shape_cast %55 : vector<1x16x16xf32> to vector<16x16xf32>
    %cst_32 = arith.constant dense<0.000000e+00> : vector<16x32xf32>
    %57 = tpu.matmul %56, %0, %cst_32 {dimension_numbers = #tpu.dot_dimension_numbers<[1], [0], [0], [1], [0, 0, 1, 1], [], []>} : vector<16x16xf32>, vector<16x32xf32>, vector<16x32xf32> -> vector<16x32xf32>
    %cst_33 = arith.constant dense<0.000000e+00> : vector<16x32xf32>
    %58 = tpu.matmul %46, %1, %cst_33 {dimension_numbers = #tpu.dot_dimension_numbers<[1], [0], [0], [1], [0, 0, 1, 1], [], []>} : vector<16x32xf32>, vector<32x32xf32>, vector<16x32xf32> -> vector<16x32xf32>
    %59 = arith.addf %57, %58 : vector<16x32xf32>
    %60 = vector.broadcast %3 : vector<1x32xf32> to vector<16x32xf32>
    %61 = arith.addf %59, %60 : vector<16x32xf32>
    %62 = math.tanh %61 : vector<16x32xf32>
    %cst_34 = arith.constant dense<0.000000e+00> : vector<16x16xf32>
    %63 = tpu.matmul %62, %2, %cst_34 {dimension_numbers = #tpu.dot_dimension_numbers<[1], [0], [0], [1], [0, 0, 1, 1], [], []>} : vector<16x32xf32>, vector<32x16xf32>, vector<16x16xf32> -> vector<16x16xf32>
    %64 = vector.broadcast %4 : vector<1x16xf32> to vector<16x16xf32>
    %65 = arith.addf %63, %64 : vector<16x16xf32>
    %66 = arith.index_cast %c3_i32 : i32 to index
    %c0_35 = arith.constant 0 : index
    %c0_36 = arith.constant 0 : index
    %67 = vector.load %arg7[%66, %c0_35, %c0_36] : memref<8x16x16xf32, #tpu.memory_space<vmem>>, vector<1x16x16xf32>
    %68 = vector.shape_cast %67 : vector<1x16x16xf32> to vector<16x16xf32>
    %69 = vector.shape_cast %65 : vector<16x16xf32> to vector<1x16x16xf32>
    tpu.vector_store %arg7[%66, %c0_35, %c0_36], %69 {strides = array<i32>} : memref<8x16x16xf32, #tpu.memory_space<vmem>>, vector<1x16x16xf32>,
    %c4_i32 = arith.constant 4 : i32
    %70 = arith.index_cast %c4_i32 : i32 to index
    %c0_37 = arith.constant 0 : index
    %c0_38 = arith.constant 0 : index
    %71 = vector.load %arg1[%70, %c0_37, %c0_38] : memref<8x16x16xf32, #tpu.memory_space<vmem>>, vector<1x16x16xf32>
    %72 = vector.shape_cast %71 : vector<1x16x16xf32> to vector<16x16xf32>
    %cst_39 = arith.constant dense<0.000000e+00> : vector<16x32xf32>
    %73 = tpu.matmul %72, %0, %cst_39 {dimension_numbers = #tpu.dot_dimension_numbers<[1], [0], [0], [1], [0, 0, 1, 1], [], []>} : vector<16x16xf32>, vector<16x32xf32>, vector<16x32xf32> -> vector<16x32xf32>
    %cst_40 = arith.constant dense<0.000000e+00> : vector<16x32xf32>
    %74 = tpu.matmul %62, %1, %cst_40 {dimension_numbers = #tpu.dot_dimension_numbers<[1], [0], [0], [1], [0, 0, 1, 1], [], []>} : vector<16x32xf32>, vector<32x32xf32>, vector<16x32xf32> -> vector<16x32xf32>
    %75 = arith.addf %73, %74 : vector<16x32xf32>
    %76 = vector.broadcast %3 : vector<1x32xf32> to vector<16x32xf32>
    %77 = arith.addf %75, %76 : vector<16x32xf32>
    %78 = math.tanh %77 : vector<16x32xf32>
    %cst_41 = arith.constant dense<0.000000e+00> : vector<16x16xf32>
    %79 = tpu.matmul %78, %2, %cst_41 {dimension_numbers = #tpu.dot_dimension_numbers<[1], [0], [0], [1], [0, 0, 1, 1], [], []>} : vector<16x32xf32>, vector<32x16xf32>, vector<16x16xf32> -> vector<16x16xf32>
    %80 = vector.broadcast %4 : vector<1x16xf32> to vector<16x16xf32>
    %81 = arith.addf %79, %80 : vector<16x16xf32>
    %82 = arith.index_cast %c4_i32 : i32 to index
    %c0_42 = arith.constant 0 : index
    %c0_43 = arith.constant 0 : index
    %83 = vector.load %arg7[%82, %c0_42, %c0_43] : memref<8x16x16xf32, #tpu.memory_space<vmem>>, vector<1x16x16xf32>
    %84 = vector.shape_cast %83 : vector<1x16x16xf32> to vector<16x16xf32>
    %85 = vector.shape_cast %81 : vector<16x16xf32> to vector<1x16x16xf32>
    tpu.vector_store %arg7[%82, %c0_42, %c0_43], %85 {strides = array<i32>} : memref<8x16x16xf32, #tpu.memory_space<vmem>>, vector<1x16x16xf32>,
    %c5_i32 = arith.constant 5 : i32
    %86 = arith.index_cast %c5_i32 : i32 to index
    %c0_44 = arith.constant 0 : index
    %c0_45 = arith.constant 0 : index
    %87 = vector.load %arg1[%86, %c0_44, %c0_45] : memref<8x16x16xf32, #tpu.memory_space<vmem>>, vector<1x16x16xf32>
    %88 = vector.shape_cast %87 : vector<1x16x16xf32> to vector<16x16xf32>
    %cst_46 = arith.constant dense<0.000000e+00> : vector<16x32xf32>
    %89 = tpu.matmul %88, %0, %cst_46 {dimension_numbers = #tpu.dot_dimension_numbers<[1], [0], [0], [1], [0, 0, 1, 1], [], []>} : vector<16x16xf32>, vector<16x32xf32>, vector<16x32xf32> -> vector<16x32xf32>
    %cst_47 = arith.constant dense<0.000000e+00> : vector<16x32xf32>
    %90 = tpu.matmul %78, %1, %cst_47 {dimension_numbers = #tpu.dot_dimension_numbers<[1], [0], [0], [1], [0, 0, 1, 1], [], []>} : vector<16x32xf32>, vector<32x32xf32>, vector<16x32xf32> -> vector<16x32xf32>
    %91 = arith.addf %89, %90 : vector<16x32xf32>
    %92 = vector.broadcast %3 : vector<1x32xf32> to vector<16x32xf32>
    %93 = arith.addf %91, %92 : vector<16x32xf32>
    %94 = math.tanh %93 : vector<16x32xf32>
    %cst_48 = arith.constant dense<0.000000e+00> : vector<16x16xf32>
    %95 = tpu.matmul %94, %2, %cst_48 {dimension_numbers = #tpu.dot_dimension_numbers<[1], [0], [0], [1], [0, 0, 1, 1], [], []>} : vector<16x32xf32>, vector<32x16xf32>, vector<16x16xf32> -> vector<16x16xf32>
    %96 = vector.broadcast %4 : vector<1x16xf32> to vector<16x16xf32>
    %97 = arith.addf %95, %96 : vector<16x16xf32>
    %98 = arith.index_cast %c5_i32 : i32 to index
    %c0_49 = arith.constant 0 : index
    %c0_50 = arith.constant 0 : index
    %99 = vector.load %arg7[%98, %c0_49, %c0_50] : memref<8x16x16xf32, #tpu.memory_space<vmem>>, vector<1x16x16xf32>
    %100 = vector.shape_cast %99 : vector<1x16x16xf32> to vector<16x16xf32>
    %101 = vector.shape_cast %97 : vector<16x16xf32> to vector<1x16x16xf32>
    tpu.vector_store %arg7[%98, %c0_49, %c0_50], %101 {strides = array<i32>} : memref<8x16x16xf32, #tpu.memory_space<vmem>>, vector<1x16x16xf32>,
    %c6_i32 = arith.constant 6 : i32
    %102 = arith.index_cast %c6_i32 : i32 to index
    %c0_51 = arith.constant 0 : index
    %c0_52 = arith.constant 0 : index
    %103 = vector.load %arg1[%102, %c0_51, %c0_52] : memref<8x16x16xf32, #tpu.memory_space<vmem>>, vector<1x16x16xf32>
    %104 = vector.shape_cast %103 : vector<1x16x16xf32> to vector<16x16xf32>
    %cst_53 = arith.constant dense<0.000000e+00> : vector<16x32xf32>
    %105 = tpu.matmul %104, %0, %cst_53 {dimension_numbers = #tpu.dot_dimension_numbers<[1], [0], [0], [1], [0, 0, 1, 1], [], []>} : vector<16x16xf32>, vector<16x32xf32>, vector<16x32xf32> -> vector<16x32xf32>
    %cst_54 = arith.constant dense<0.000000e+00> : vector<16x32xf32>
    %106 = tpu.matmul %94, %1, %cst_54 {dimension_numbers = #tpu.dot_dimension_numbers<[1], [0], [0], [1], [0, 0, 1, 1], [], []>} : vector<16x32xf32>, vector<32x32xf32>, vector<16x32xf32> -> vector<16x32xf32>
    %107 = arith.addf %105, %106 : vector<16x32xf32>
    %108 = vector.broadcast %3 : vector<1x32xf32> to vector<16x32xf32>
    %109 = arith.addf %107, %108 : vector<16x32xf32>
    %110 = math.tanh %109 : vector<16x32xf32>
    %cst_55 = arith.constant dense<0.000000e+00> : vector<16x16xf32>
    %111 = tpu.matmul %110, %2, %cst_55 {dimension_numbers = #tpu.dot_dimension_numbers<[1], [0], [0], [1], [0, 0, 1, 1], [], []>} : vector<16x32xf32>, vector<32x16xf32>, vector<16x16xf32> -> vector<16x16xf32>
    %112 = vector.broadcast %4 : vector<1x16xf32> to vector<16x16xf32>
    %113 = arith.addf %111, %112 : vector<16x16xf32>
    %114 = arith.index_cast %c6_i32 : i32 to index
    %c0_56 = arith.constant 0 : index
    %c0_57 = arith.constant 0 : index
    %115 = vector.load %arg7[%114, %c0_56, %c0_57] : memref<8x16x16xf32, #tpu.memory_space<vmem>>, vector<1x16x16xf32>
    %116 = vector.shape_cast %115 : vector<1x16x16xf32> to vector<16x16xf32>
    %117 = vector.shape_cast %113 : vector<16x16xf32> to vector<1x16x16xf32>
    tpu.vector_store %arg7[%114, %c0_56, %c0_57], %117 {strides = array<i32>} : memref<8x16x16xf32, #tpu.memory_space<vmem>>, vector<1x16x16xf32>,
    %c7_i32 = arith.constant 7 : i32
    %118 = arith.index_cast %c7_i32 : i32 to index
    %c0_58 = arith.constant 0 : index
    %c0_59 = arith.constant 0 : index
    %119 = vector.load %arg1[%118, %c0_58, %c0_59] : memref<8x16x16xf32, #tpu.memory_space<vmem>>, vector<1x16x16xf32>
    %120 = vector.shape_cast %119 : vector<1x16x16xf32> to vector<16x16xf32>
    %cst_60 = arith.constant dense<0.000000e+00> : vector<16x32xf32>
    %121 = tpu.matmul %120, %0, %cst_60 {dimension_numbers = #tpu.dot_dimension_numbers<[1], [0], [0], [1], [0, 0, 1, 1], [], []>} : vector<16x16xf32>, vector<16x32xf32>, vector<16x32xf32> -> vector<16x32xf32>
    %cst_61 = arith.constant dense<0.000000e+00> : vector<16x32xf32>
    %122 = tpu.matmul %110, %1, %cst_61 {dimension_numbers = #tpu.dot_dimension_numbers<[1], [0], [0], [1], [0, 0, 1, 1], [], []>} : vector<16x32xf32>, vector<32x32xf32>, vector<16x32xf32> -> vector<16x32xf32>
    %123 = arith.addf %121, %122 : vector<16x32xf32>
    %124 = vector.broadcast %3 : vector<1x32xf32> to vector<16x32xf32>
    %125 = arith.addf %123, %124 : vector<16x32xf32>
    %126 = math.tanh %125 : vector<16x32xf32>
    %cst_62 = arith.constant dense<0.000000e+00> : vector<16x16xf32>
    %127 = tpu.matmul %126, %2, %cst_62 {dimension_numbers = #tpu.dot_dimension_numbers<[1], [0], [0], [1], [0, 0, 1, 1], [], []>} : vector<16x32xf32>, vector<32x16xf32>, vector<16x16xf32> -> vector<16x16xf32>
    %128 = vector.broadcast %4 : vector<1x16xf32> to vector<16x16xf32>
    %129 = arith.addf %127, %128 : vector<16x16xf32>
    %130 = arith.index_cast %c7_i32 : i32 to index
    %c0_63 = arith.constant 0 : index
    %c0_64 = arith.constant 0 : index
    %131 = vector.load %arg7[%130, %c0_63, %c0_64] : memref<8x16x16xf32, #tpu.memory_space<vmem>>, vector<1x16x16xf32>
    %132 = vector.shape_cast %131 : vector<1x16x16xf32> to vector<16x16xf32>
    %133 = vector.shape_cast %129 : vector<16x16xf32> to vector<1x16x16xf32>
    tpu.vector_store %arg7[%130, %c0_63, %c0_64], %133 {strides = array<i32>} : memref<8x16x16xf32, #tpu.memory_space<vmem>>, vector<1x16x16xf32>,
    %c8_i32 = arith.constant 8 : i32
    return
  }
  func.func @transform_0(%arg0: i32) -> (i32, i32, i32) {
    %c0_i32 = arith.constant 0 : i32
    %c0_i32_0 = arith.constant 0 : i32
    %c0_i32_1 = arith.constant 0 : i32
    return %c0_i32, %arg0, %c0_i32_0 : i32, i32, i32
  }
  func.func @transform_1(%arg0: i32) -> (i32, i32) {
    %c0_i32 = arith.constant 0 : i32
    %c0_i32_0 = arith.constant 0 : i32
    %c0_i32_1 = arith.constant 0 : i32
    return %c0_i32, %c0_i32_0 : i32, i32
  }
  func.func @transform_2(%arg0: i32) -> (i32, i32) {
    %c0_i32 = arith.constant 0 : i32
    %c0_i32_0 = arith.constant 0 : i32
    %c0_i32_1 = arith.constant 0 : i32
    return %c0_i32, %c0_i32_0 : i32, i32
  }
  func.func @transform_3(%arg0: i32) -> (i32, i32) {
    %c0_i32 = arith.constant 0 : i32
    %c0_i32_0 = arith.constant 0 : i32
    %c0_i32_1 = arith.constant 0 : i32
    return %c0_i32, %c0_i32_0 : i32, i32
  }
  func.func @transform_4(%arg0: i32) -> (i32, i32) {
    %c0_i32 = arith.constant 0 : i32
    %c0_i32_0 = arith.constant 0 : i32
    %c0_i32_1 = arith.constant 0 : i32
    return %c0_i32, %c0_i32_0 : i32, i32
  }
  func.func @transform_5(%arg0: i32) -> (i32, i32) {
    %c0_i32 = arith.constant 0 : i32
    %c0_i32_0 = arith.constant 0 : i32
    %c0_i32_1 = arith.constant 0 : i32
    return %c0_i32, %c0_i32_0 : i32, i32
  }
  func.func @transform_6(%arg0: i32) -> (i32, i32, i32) {
    %c0_i32 = arith.constant 0 : i32
    %c0_i32_0 = arith.constant 0 : i32
    %c0_i32_1 = arith.constant 0 : i32
    return %c0_i32, %arg0, %c0_i32_0 : i32, i32, i32
  }
}

</mosaic_0001>

<llo_original>
// kernel: tpu_custom_call.1
$region0: #{tpu_custom_call.1}
  #allocation0 [shape = 'u32[]', space=smem, size = 0x4, offset = 0x4, fixed_abs, tag = 'smem constant byte address 0x4 - core index']
  #allocation1 [shape = 'u32[144,128]{1,0:T(1,128)}', space=vmem, size = 0x12000, scoped, tag = 'internal scratch']
  %s0 = inlined_call_operand.hbm [shape: f32[8,16,16], index: 0, kind: input, shape index: {}]
  %s1 = inlined_call_operand.vmem [shape: f32[16,32], index: 1, kind: input, shape index: {}]
  %s2 = inlined_call_operand.vmem [shape: f32[32,32], index: 2, kind: input, shape index: {}]
  %s3 = inlined_call_operand.vmem [shape: f32[1,32], index: 3, kind: input, shape index: {}]
  %s4 = inlined_call_operand.vmem [shape: f32[32,16], index: 4, kind: input, shape index: {}]
  %s5 = inlined_call_operand.vmem [shape: f32[1,16], index: 5, kind: input, shape index: {}]
  %s6 = inlined_call_operand.hbm [shape: f32[8,16,16], index: 6, kind: output, shape index: {}]
  %s7 = sld [smem:[#allocation0]]
  $region38: #{tpu_custom_call.1} parent=0
    _
  %s9 = ssub.s32 1, %s7
  %s10 = scalar_select 0, %s9, %s7
  $region1: #{tpu_custom_call.1} parent=0
    #allocation2 [shape = 'u8[65536]{0}', space=vmem, size = 0x10000, scoped, tag = 'input window, operand 0, single buffered']
    #allocation3 [shape = 's32[1]{0}', space=sflag, size = 0x4, scoped, tag = 'scoped memory for tpu_custom_call.1']
    #allocation4 [shape = 's32[1]{0}', space=sflag, size = 0x4, scoped, tag = 'scoped memory for tpu_custom_call.1']
    #allocation5 [shape = 'u8[65536]{0}', space=vmem, size = 0x10000, scoped, tag = 'output window, operand 0, single buffered']
    %11 = vsyncpa [#allocation3], 0
    %12 = vsyncpa [#allocation4], 0
    // Predicated region
    $region2: #{tpu_custom_call.1} parent=1 // pred_check
      _
    $region3: #{tpu_custom_call.1} parent=1 // pred_check_branch
      %14 = sbr.rel (0) target = $region5
    $region4: #{tpu_custom_call.1} parent=1 // pred_region
      %s16 = ssub.s32 2048, 2048
      %17 = vsyncadd [#allocation3], %s16
      %s18 = sshll.u32 [#allocation2], 4
      %s19 = int_to_ptr.vmem [resolvable:$true] %s18
      %24 = dma.hbm_to_vmem [thread:$0]  %s0, 2048, %s19, [#allocation3], 128, 128, 8
    $region5: #{tpu_custom_call.1} parent=1 // pred_fallthru
      _
    // Predicated region
    $region6: #{tpu_custom_call.1} parent=1 // pred_check
      _
    $region7: #{tpu_custom_call.1} parent=1 // pred_check_branch
      %26 = sbr.rel (0) target = $region9
    $region8: #{tpu_custom_call.1} parent=1 // pred_region
      _
    $region9: #{tpu_custom_call.1} parent=1 // pred_fallthru
      _
    // Predicated region
    $region10: #{tpu_custom_call.1} parent=1 // pred_check
      _
    $region11: #{tpu_custom_call.1} parent=1 // pred_check_branch
      %28 = sbr.rel (0) target = $region13
    $region12: #{tpu_custom_call.1} parent=1 // pred_region
      _
    $region13: #{tpu_custom_call.1} parent=1 // pred_fallthru
      _
    // Predicated region
    $region14: #{tpu_custom_call.1} parent=1 // pred_check
      _
    $region15: #{tpu_custom_call.1} parent=1 // pred_check_branch
      %30 = sbr.rel (0) target = $region17
    $region16: #{tpu_custom_call.1} parent=1 // pred_region
      _
    $region17: #{tpu_custom_call.1} parent=1 // pred_fallthru
      _
    // Predicated region
    $region18: #{tpu_custom_call.1} parent=1 // pred_check
      _
    $region19: #{tpu_custom_call.1} parent=1 // pred_check_branch
      %32 = sbr.rel (0) target = $region21
    $region20: #{tpu_custom_call.1} parent=1 // pred_region
      _
    $region21: #{tpu_custom_call.1} parent=1 // pred_fallthru
      _
    // Predicated region
    $region22: #{tpu_custom_call.1} parent=1 // pred_check
      _
    $region23: #{tpu_custom_call.1} parent=1 // pred_check_branch
      %34 = sbr.rel (0) target = $region25
    $region24: #{tpu_custom_call.1} parent=1 // pred_region
      _
    $region25: #{tpu_custom_call.1} parent=1 // pred_fallthru
      _
    // Predicated region
    $region26: #{tpu_custom_call.1} parent=1 // pred_check
      _
    $region27: #{tpu_custom_call.1} parent=1 // pred_check_branch
      %36 = sbr.rel (0) target = $region29
    $region28: #{tpu_custom_call.1} parent=1 // pred_region
      %37 = dma.done [#allocation3], 2048
    $region29: #{tpu_custom_call.1} parent=1 // pred_fallthru
      _
    %v38 = vld [vmem:[%s1] sm:$0xff]
    %v39 = vld [vmem:[%s1 + $0x8] sm:$0xff]
    %v40 = vld [vmem:[%s2] sm:$0xff]
    %v41 = vld [vmem:[%s2 + $0x8] sm:$0xff]
    %v42 = vld [vmem:[%s2 + $0x10] sm:$0xff]
    %v43 = vld [vmem:[%s2 + $0x18] sm:$0xff]
    %v44 = vld [vmem:[%s4] sm:$0xff]
    %v45 = vld [vmem:[%s4 + $0x8] sm:$0xff]
    %v46 = vld [vmem:[%s4 + $0x10] sm:$0xff]
    %v47 = vld [vmem:[%s4 + $0x18] sm:$0xff]
    %v48 = vld [vmem:[%s3] sm:$0x1]
    %v49 = vld [vmem:[%s5] sm:$0x1]
    %v50 = vld [vmem:[#allocation2] sm:$0xff]
    %v51 = vld [vmem:[#allocation2 + $0x8] sm:$0xff]
    %vm52 = vcmask 261120
    %v54 = vsel %vm52, 0.0, 0
    %56 = vmatprep.subr.mxu0 0.0
    %57 = vmatpush1.msra.mxu0 0.0
    %58 = vmatprep.subr.mxu0 0.0
    %59 = vmatpush1.msra.mxu0 0.0
    %60 = vmatprep.subr.mxu0 0.0
    %61 = vmatpush1.msra.mxu0 0.0
    %62 = vmatprep.subr.mxu0 0.0
    %63 = vmatpush1.msra.mxu0 0.0
    %64 = vmatprep.subr.mxu0 0.0
    %65 = vmatpush1.msra.mxu0 0.0
    %66 = vmatprep.subr.mxu0 0.0
    %67 = vmatpush1.msra.mxu0 0.0
    %68 = vmatprep.subr.mxu0 0.0
    %69 = vmatpush1.msra.mxu0 0.0
    %70 = vmatprep.subr.mxu0 0.0
    %71 = vmatpush1.msra.mxu0 0.0
    %72 = vmatprep.subr.mxu0 0.0
    %73 = vmatpush1.msra.mxu0 0.0
    %74 = vmatprep.subr.mxu0 0.0
    %75 = vmatpush1.msra.mxu0 0.0
    %76 = vmatprep.subr.mxu0 0.0
    %77 = vmatpush1.msra.mxu0 0.0
    %78 = vmatprep.subr.mxu0 0.0
    %79 = vmatpush1.msra.mxu0 0.0
    %80 = vmatprep.subr.mxu0 0.0
    %81 = vmatpush1.msra.mxu0 %v43
    %82 = vmatprep.subr.mxu0 0.0
    %83 = vmatpush1.msra.mxu0 %v42
    %84 = vmatprep.subr.mxu0 0.0
    %85 = vmatpush1.msra.mxu0 %v41
    %86 = vmatprep.subr.mxu0 0.0
    %87 = vmatpush1.msra.mxu0 %v40
    %88 = vmatprep.subr.mxu0 0.0
    %89 = vmatpush2.msra.mxu0 0.0
    %90 = vmatprep.subr.mxu0 0.0
    %91 = vmatpush2.msra.mxu0 0.0
    %92 = vmatprep.subr.mxu0 0.0
    %93 = vmatpush2.msra.mxu0 0.0
    %94 = vmatprep.subr.mxu0 0.0
    %95 = vmatpush2.msra.mxu0 0.0
    %96 = vmatprep.subr.mxu0 0.0
    %97 = vmatpush2.msra.mxu0 0.0
    %98 = vmatprep.subr.mxu0 0.0
    %99 = vmatpush2.msra.mxu0 0.0
    %100 = vmatprep.subr.mxu0 0.0
    %101 = vmatpush2.msra.mxu0 0.0
    %102 = vmatprep.subr.mxu0 0.0
    %103 = vmatpush2.msra.mxu0 0.0
    %104 = vmatprep.subr.mxu0 0.0
    %105 = vmatpush2.msra.mxu0 0.0
    %106 = vmatprep.subr.mxu0 0.0
    %107 = vmatpush2.msra.mxu0 0.0
    %108 = vmatprep.subr.mxu0 0.0
    %109 = vmatpush2.msra.mxu0 0.0
    %110 = vmatprep.subr.mxu0 0.0
    %111 = vmatpush2.msra.mxu0 0.0
    %112 = vmatprep.subr.mxu0 0.0
    %113 = vmatpush2.msra.mxu0 0.0
    %114 = vmatprep.subr.mxu0 0.0
    %115 = vmatpush2.msra.mxu0 0.0
    %116 = vmatprep.subr.mxu0 0.0
    %117 = vmatpush2.msra.mxu0 0.0
    %118 = vmatprep.subr.mxu0 0.0
    %119 = vmatpush2.msra.mxu0 0.0
    %120 = vmatprep.mubr.f32.mxu0 0.0
    %121 = vmatmul.mubr.f32.gmra.mxu0 %v54
    %v122 = vpop.f32.mrf.mxu0
    %v123 = vadd.f32 0.0, %v122
    %v124 = vpop.f32.mrf.mxu0
    %125 = vmatprep.mubr.f32.mxu0 0.0
    %126 = vmatmul.mubr.f32.gmra.mxu0 %v54
    %v127 = vpop.f32.mrf.mxu0
    %v128 = vadd.f32 0.0, %v127
    %v129 = vpop.f32.mrf.mxu0
    %130 = vdwg.mxu0
    %vm131 = vcmask 130048
    %v133 = vsel %vm131, %v50, 0
    %v136 = vsel %vm131, %v51, 0
    %138 = vmatprep.subr.mxu0 0.0
    %139 = vmatpush1.msra.mxu0 0.0
    %140 = vmatprep.subr.mxu0 0.0
    %141 = vmatpush1.msra.mxu0 0.0
    %142 = vmatprep.subr.mxu0 0.0
    %143 = vmatpush1.msra.mxu0 0.0
    %144 = vmatprep.subr.mxu0 0.0
    %145 = vmatpush1.msra.mxu0 0.0
    %146 = vmatprep.subr.mxu0 0.0
    %147 = vmatpush1.msra.mxu0 0.0
    %148 = vmatprep.subr.mxu0 0.0
    %149 = vmatpush1.msra.mxu0 0.0
    %150 = vmatprep.subr.mxu0 0.0
    %151 = vmatpush1.msra.mxu0 0.0
    %152 = vmatprep.subr.mxu0 0.0
    %153 = vmatpush1.msra.mxu0 0.0
    %154 = vmatprep.subr.mxu0 0.0
    %155 = vmatpush1.msra.mxu0 0.0
    %156 = vmatprep.subr.mxu0 0.0
    %157 = vmatpush1.msra.mxu0 0.0
    %158 = vmatprep.subr.mxu0 0.0
    %159 = vmatpush1.msra.mxu0 0.0
    %160 = vmatprep.subr.mxu0 0.0
    %161 = vmatpush1.msra.mxu0 0.0
    %162 = vmatprep.subr.mxu0 0.0
    %163 = vmatpush1.msra.mxu0 0.0
    %164 = vmatprep.subr.mxu0 0.0
    %165 = vmatpush1.msra.mxu0 0.0
    %166 = vmatprep.subr.mxu0 0.0
    %167 = vmatpush1.msra.mxu0 %v39
    %168 = vmatprep.subr.mxu0 0.0
    %169 = vmatpush1.msra.mxu0 %v38
    %170 = vmatprep.subr.mxu0 0.0
    %171 = vmatpush2.msra.mxu0 0.0
    %172 = vmatprep.subr.mxu0 0.0
    %173 = vmatpush2.msra.mxu0 0.0
    %174 = vmatprep.subr.mxu0 0.0
    %175 = vmatpush2.msra.mxu0 0.0
    %176 = vmatprep.subr.mxu0 0.0
    %177 = vmatpush2.msra.mxu0 0.0
    %178 = vmatprep.subr.mxu0 0.0
    %179 = vmatpush2.msra.mxu0 0.0
    %180 = vmatprep.subr.mxu0 0.0
    %181 = vmatpush2.msra.mxu0 0.0
    %182 = vmatprep.subr.mxu0 0.0
    %183 = vmatpush2.msra.mxu0 0.0
    %184 = vmatprep.subr.mxu0 0.0
    %185 = vmatpush2.msra.mxu0 0.0
    %186 = vmatprep.subr.mxu0 0.0
    %187 = vmatpush2.msra.mxu0 0.0
    %188 = vmatprep.subr.mxu0 0.0
    %189 = vmatpush2.msra.mxu0 0.0
    %190 = vmatprep.subr.mxu0 0.0
    %191 = vmatpush2.msra.mxu0 0.0
    %192 = vmatprep.subr.mxu0 0.0
    %193 = vmatpush2.msra.mxu0 0.0
    %194 = vmatprep.subr.mxu0 0.0
    %195 = vmatpush2.msra.mxu0 0.0
    %196 = vmatprep.subr.mxu0 0.0
    %197 = vmatpush2.msra.mxu0 0.0
    %198 = vmatprep.subr.mxu0 0.0
    %199 = vmatpush2.msra.mxu0 0.0
    %200 = vmatprep.subr.mxu0 0.0
    %201 = vmatpush2.msra.mxu0 0.0
    %202 = vmatprep.mubr.f32.mxu0 0.0
    %203 = vmatmul.mubr.f32.gmra.mxu0 %v133
    %v204 = vpop.f32.mrf.mxu0
    %v205 = vadd.f32 %v123, %v204
    %v206 = vpop.f32.mrf.mxu0
    %207 = vmatprep.mubr.f32.mxu0 0.0
    %208 = vmatmul.mubr.f32.gmra.mxu0 %v136
    %v209 = vpop.f32.mrf.mxu0
    %v210 = vadd.f32 %v128, %v209
    %v211 = vpop.f32.mrf.mxu0
    %212 = vdwg.mxu0
    %v214 = vlaneseq
    %v215 = vshrl.u32 %v214, 7
    %v216 = vsub.s32 0, %v215
    %v217 = vrot.slane %v48, %v216
    %v219 = vadd.f32 %v205, %v217
    %v220 = vadd.f32 %v210, %v217
    %v221 = vtanh.pop %v219
    %v222 = vtanh.pop %v220
    %v224 = vlaneseq
    %v225 = vshrl.u32 %v224, 7
    %v226 = vsub.s32 0, %v225
    %v227 = vrot.slane %v49, %v226
    %v230 = vsel %vm52, %v221, 0
    %v233 = vsel %vm52, %v222, 0
    %235 = vmatprep.subr.mxu0 0.0
    %236 = vmatpush1.msra.mxu0 0.0
    %237 = vmatprep.subr.mxu0 0.0
    %238 = vmatpush1.msra.mxu0 0.0
    %239 = vmatprep.subr.mxu0 0.0
    %240 = vmatpush1.msra.mxu0 0.0
    %241 = vmatprep.subr.mxu0 0.0
    %242 = vmatpush1.msra.mxu0 0.0
    %243 = vmatprep.subr.mxu0 0.0
    %244 = vmatpush1.msra.mxu0 0.0
    %245 = vmatprep.subr.mxu0 0.0
    %246 = vmatpush1.msra.mxu0 0.0
    %247 = vmatprep.subr.mxu0 0.0
    %248 = vmatpush1.msra.mxu0 0.0
    %249 = vmatprep.subr.mxu0 0.0
    %250 = vmatpush1.msra.mxu0 0.0
    %251 = vmatprep.subr.mxu0 0.0
    %252 = vmatpush1.msra.mxu0 0.0
    %253 = vmatprep.subr.mxu0 0.0
    %254 = vmatpush1.msra.mxu0 0.0
    %255 = vmatprep.subr.mxu0 0.0
    %256 = vmatpush1.msra.mxu0 0.0
    %257 = vmatprep.subr.mxu0 0.0
    %258 = vmatpush1.msra.mxu0 0.0
    %259 = vmatprep.subr.mxu0 0.0
    %260 = vmatpush1.msra.mxu0 %v47
    %261 = vmatprep.subr.mxu0 0.0
    %262 = vmatpush1.msra.mxu0 %v46
    %263 = vmatprep.subr.mxu0 0.0
    %264 = vmatpush1.msra.mxu0 %v45
    %265 = vmatprep.subr.mxu0 0.0
    %266 = vmatpush1.msra.mxu0 %v44
    %267 = vmatprep.subr.mxu0 0.0
    %268 = vmatpush2.msra.mxu0 0.0
    %269 = vmatprep.subr.mxu0 0.0
    %270 = vmatpush2.msra.mxu0 0.0
    %271 = vmatprep.subr.mxu0 0.0
    %272 = vmatpush2.msra.mxu0 0.0
    %273 = vmatprep.subr.mxu0 0.0
    %274 = vmatpush2.msra.mxu0 0.0
    %275 = vmatprep.subr.mxu0 0.0
    %276 = vmatpush2.msra.mxu0 0.0
    %277 = vmatprep.subr.mxu0 0.0
    %278 = vmatpush2.msra.mxu0 0.0
    %279 = vmatprep.subr.mxu0 0.0
    %280 = vmatpush2.msra.mxu0 0.0
    %281 = vmatprep.subr.mxu0 0.0
    %282 = vmatpush2.msra.mxu0 0.0
    %283 = vmatprep.subr.mxu0 0.0
    %284 = vmatpush2.msra.mxu0 0.0
    %285 = vmatprep.subr.mxu0 0.0
    %286 = vmatpush2.msra.mxu0 0.0
    %287 = vmatprep.subr.mxu0 0.0
    %288 = vmatpush2.msra.mxu0 0.0
    %289 = vmatprep.subr.mxu0 0.0
    %290 = vmatpush2.msra.mxu0 0.0
    %291 = vmatprep.subr.mxu0 0.0
    %292 = vmatpush2.msra.mxu0 0.0
    %293 = vmatprep.subr.mxu0 0.0
    %294 = vmatpush2.msra.mxu0 0.0
    %295 = vmatprep.subr.mxu0 0.0
    %296 = vmatpush2.msra.mxu0 0.0
    %297 = vmatprep.subr.mxu0 0.0
    %298 = vmatpush2.msra.mxu0 0.0
    %299 = vmatprep.mubr.f32.mxu0 0.0
    %300 = vmatmul.mubr.f32.gmra.mxu0 %v230
    %v301 = vpop.f32.mrf.mxu0
    %v302 = vadd.f32 %v227, %v301
    %v303 = vpop.f32.mrf.mxu0
    %304 = vmatprep.mubr.f32.mxu0 0.0
    %305 = vmatmul.mubr.f32.gmra.mxu0 %v233
    %v306 = vpop.f32.mrf.mxu0
    %v307 = vadd.f32 %v227, %v306
    %v308 = vpop.f32.mrf.mxu0
    %309 = vdwg.mxu0
    %310 = vst.msk [vmem:[#allocation5] sm:$0xff] %vm131, %v302
    %311 = vst.msk [vmem:[#allocation5 + $0x8] sm:$0xff] %vm131, %v307
    %s312 = scalar_lea.vmem [#allocation2], 16
    %v313 = vld [vmem:[%s312] sm:$0xff]
    %v314 = vld [vmem:[%s312 + $0x8] sm:$0xff]
    %315 = vmatprep.subr.mxu0 0.0
    %316 = vmatpush1.msra.mxu0 0.0
    %317 = vmatprep.subr.mxu0 0.0
    %318 = vmatpush1.msra.mxu0 0.0
    %319 = vmatprep.subr.mxu0 0.0
    %320 = vmatpush1.msra.mxu0 0.0
    %321 = vmatprep.subr.mxu0 0.0
    %322 = vmatpush1.msra.mxu0 0.0
    %323 = vmatprep.subr.mxu0 0.0
    %324 = vmatpush1.msra.mxu0 0.0
    %325 = vmatprep.subr.mxu0 0.0
    %326 = vmatpush1.msra.mxu0 0.0
    %327 = vmatprep.subr.mxu0 0.0
    %328 = vmatpush1.msra.mxu0 0.0
    %329 = vmatprep.subr.mxu0 0.0
    %330 = vmatpush1.msra.mxu0 0.0
    %331 = vmatprep.subr.mxu0 0.0
    %332 = vmatpush1.msra.mxu0 0.0
    %333 = vmatprep.subr.mxu0 0.0
    %334 = vmatpush1.msra.mxu0 0.0
    %335 = vmatprep.subr.mxu0 0.0
    %336 = vmatpush1.msra.mxu0 0.0
    %337 = vmatprep.subr.mxu0 0.0
    %338 = vmatpush1.msra.mxu0 0.0
    %339 = vmatprep.subr.mxu0 0.0
    %340 = vmatpush1.msra.mxu0 %v43
    %341 = vmatprep.subr.mxu0 0.0
    %342 = vmatpush1.msra.mxu0 %v42
    %343 = vmatprep.subr.mxu0 0.0
    %344 = vmatpush1.msra.mxu0 %v41
    %345 = vmatprep.subr.mxu0 0.0
    %346 = vmatpush1.msra.mxu0 %v40
    %347 = vmatprep.subr.mxu0 0.0
    %348 = vmatpush2.msra.mxu0 0.0
    %349 = vmatprep.subr.mxu0 0.0
    %350 = vmatpush2.msra.mxu0 0.0
    %351 = vmatprep.subr.mxu0 0.0
    %352 = vmatpush2.msra.mxu0 0.0
    %353 = vmatprep.subr.mxu0 0.0
    %354 = vmatpush2.msra.mxu0 0.0
    %355 = vmatprep.subr.mxu0 0.0
    %356 = vmatpush2.msra.mxu0 0.0
    %357 = vmatprep.subr.mxu0 0.0
    %358 = vmatpush2.msra.mxu0 0.0
    %359 = vmatprep.subr.mxu0 0.0
    %360 = vmatpush2.msra.mxu0 0.0
    %361 = vmatprep.subr.mxu0 0.0
    %362 = vmatpush2.msra.mxu0 0.0
    %363 = vmatprep.subr.mxu0 0.0
    %364 = vmatpush2.msra.mxu0 0.0
    %365 = vmatprep.subr.mxu0 0.0
    %366 = vmatpush2.msra.mxu0 0.0
    %367 = vmatprep.subr.mxu0 0.0
    %368 = vmatpush2.msra.mxu0 0.0
    %369 = vmatprep.subr.mxu0 0.0
    %370 = vmatpush2.msra.mxu0 0.0
    %371 = vmatprep.subr.mxu0 0.0
    %372 = vmatpush2.msra.mxu0 0.0
    %373 = vmatprep.subr.mxu0 0.0
    %374 = vmatpush2.msra.mxu0 0.0
    %375 = vmatprep.subr.mxu0 0.0
    %376 = vmatpush2.msra.mxu0 0.0
    %377 = vmatprep.subr.mxu0 0.0
    %378 = vmatpush2.msra.mxu0 0.0
    %379 = vmatprep.mubr.f32.mxu0 0.0
    %380 = vmatmul.mubr.f32.gmra.mxu0 %v230
    %v381 = vpop.f32.mrf.mxu0
    %v382 = vadd.f32 0.0, %v381
    %v383 = vpop.f32.mrf.mxu0
    %384 = vmatprep.mubr.f32.mxu0 0.0
    %385 = vmatmul.mubr.f32.gmra.mxu0 %v233
    %v386 = vpop.f32.mrf.mxu0
    %v387 = vadd.f32 0.0, %v386
    %v388 = vpop.f32.mrf.mxu0
    %389 = vdwg.mxu0
    %v391 = vsel %vm131, %v313, 0
    %v394 = vsel %vm131, %v314, 0
    %396 = vmatprep.subr.mxu0 0.0
    %397 = vmatpush1.msra.mxu0 0.0
    %398 = vmatprep.subr.mxu0 0.0
    %399 = vmatpush1.msra.mxu0 0.0
    %400 = vmatprep.subr.mxu0 0.0
    %401 = vmatpush1.msra.mxu0 0.0
    %402 = vmatprep.subr.mxu0 0.0
    %403 = vmatpush1.msra.mxu0 0.0
    %404 = vmatprep.subr.mxu0 0.0
    %405 = vmatpush1.msra.mxu0 0.0
    %406 = vmatprep.subr.mxu0 0.0
    %407 = vmatpush1.msra.mxu0 0.0
    %408 = vmatprep.subr.mxu0 0.0
    %409 = vmatpush1.msra.mxu0 0.0
    %410 = vmatprep.subr.mxu0 0.0
    %411 = vmatpush1.msra.mxu0 0.0
    %412 = vmatprep.subr.mxu0 0.0
    %413 = vmatpush1.msra.mxu0 0.0
    %414 = vmatprep.subr.mxu0 0.0
    %415 = vmatpush1.msra.mxu0 0.0
    %416 = vmatprep.subr.mxu0 0.0
    %417 = vmatpush1.msra.mxu0 0.0
    %418 = vmatprep.subr.mxu0 0.0
    %419 = vmatpush1.msra.mxu0 0.0
    %420 = vmatprep.subr.mxu0 0.0
    %421 = vmatpush1.msra.mxu0 0.0
    %422 = vmatprep.subr.mxu0 0.0
    %423 = vmatpush1.msra.mxu0 0.0
    %424 = vmatprep.subr.mxu0 0.0
    %425 = vmatpush1.msra.mxu0 %v39
    %426 = vmatprep.subr.mxu0 0.0
    %427 = vmatpush1.msra.mxu0 %v38
    %428 = vmatprep.subr.mxu0 0.0
    %429 = vmatpush2.msra.mxu0 0.0
    %430 = vmatprep.subr.mxu0 0.0
    %431 = vmatpush2.msra.mxu0 0.0
    %432 = vmatprep.subr.mxu0 0.0
    %433 = vmatpush2.msra.mxu0 0.0
    %434 = vmatprep.subr.mxu0 0.0
    %435 = vmatpush2.msra.mxu0 0.0
    %436 = vmatprep.subr.mxu0 0.0
    %437 = vmatpush2.msra.mxu0 0.0
    %438 = vmatprep.subr.mxu0 0.0
    %439 = vmatpush2.msra.mxu0 0.0
    %440 = vmatprep.subr.mxu0 0.0
    %441 = vmatpush2.msra.mxu0 0.0
    %442 = vmatprep.subr.mxu0 0.0
    %443 = vmatpush2.msra.mxu0 0.0
    %444 = vmatprep.subr.mxu0 0.0
    %445 = vmatpush2.msra.mxu0 0.0
    %446 = vmatprep.subr.mxu0 0.0
    %447 = vmatpush2.msra.mxu0 0.0
    %448 = vmatprep.subr.mxu0 0.0
    %449 = vmatpush2.msra.mxu0 0.0
    %450 = vmatprep.subr.mxu0 0.0
    %451 = vmatpush2.msra.mxu0 0.0
    %452 = vmatprep.subr.mxu0 0.0
    %453 = vmatpush2.msra.mxu0 0.0
    %454 = vmatprep.subr.mxu0 0.0
    %455 = vmatpush2.msra.mxu0 0.0
    %456 = vmatprep.subr.mxu0 0.0
    %457 = vmatpush2.msra.mxu0 0.0
    %458 = vmatprep.subr.mxu0 0.0
    %459 = vmatpush2.msra.mxu0 0.0
    %460 = vmatprep.mubr.f32.mxu0 0.0
    %461 = vmatmul.mubr.f32.gmra.mxu0 %v391
    %v462 = vpop.f32.mrf.mxu0
    %v463 = vadd.f32 %v382, %v462
    %v464 = vpop.f32.mrf.mxu0
    %465 = vmatprep.mubr.f32.mxu0 0.0
    %466 = vmatmul.mubr.f32.gmra.mxu0 %v394
    %v467 = vpop.f32.mrf.mxu0
    %v468 = vadd.f32 %v387, %v467
    %v469 = vpop.f32.mrf.mxu0
    %470 = vdwg.mxu0
    %v471 = vadd.f32 %v463, %v217
    %v472 = vadd.f32 %v468, %v217
    %v473 = vtanh.pop %v471
    %v474 = vtanh.pop %v472
    %v476 = vsel %vm52, %v473, 0
    %v479 = vsel %vm52, %v474, 0
    %481 = vmatprep.subr.mxu0 0.0
    %482 = vmatpush1.msra.mxu0 0.0
    %483 = vmatprep.subr.mxu0 0.0
    %484 = vmatpush1.msra.mxu0 0.0
    %485 = vmatprep.subr.mxu0 0.0
    %486 = vmatpush1.msra.mxu0 0.0
    %487 = vmatprep.subr.mxu0 0.0
    %488 = vmatpush1.msra.mxu0 0.0
    %489 = vmatprep.subr.mxu0 0.0
    %490 = vmatpush1.msra.mxu0 0.0
    %491 = vmatprep.subr.mxu0 0.0
    %492 = vmatpush1.msra.mxu0 0.0
    %493 = vmatprep.subr.mxu0 0.0
    %494 = vmatpush1.msra.mxu0 0.0
    %495 = vmatprep.subr.mxu0 0.0
    %496 = vmatpush1.msra.mxu0 0.0
    %497 = vmatprep.subr.mxu0 0.0
    %498 = vmatpush1.msra.mxu0 0.0
    %499 = vmatprep.subr.mxu0 0.0
    %500 = vmatpush1.msra.mxu0 0.0
    %501 = vmatprep.subr.mxu0 0.0
    %502 = vmatpush1.msra.mxu0 0.0
    %503 = vmatprep.subr.mxu0 0.0
    %504 = vmatpush1.msra.mxu0 0.0
    %505 = vmatprep.subr.mxu0 0.0
    %506 = vmatpush1.msra.mxu0 %v47
    %507 = vmatprep.subr.mxu0 0.0
    %508 = vmatpush1.msra.mxu0 %v46
    %509 = vmatprep.subr.mxu0 0.0
    %510 = vmatpush1.msra.mxu0 %v45
    %511 = vmatprep.subr.mxu0 0.0
    %512 = vmatpush1.msra.mxu0 %v44
    %513 = vmatprep.subr.mxu0 0.0
    %514 = vmatpush2.msra.mxu0 0.0
    %515 = vmatprep.subr.mxu0 0.0
    %516 = vmatpush2.msra.mxu0 0.0
    %517 = vmatprep.subr.mxu0 0.0
    %518 = vmatpush2.msra.mxu0 0.0
    %519 = vmatprep.subr.mxu0 0.0
    %520 = vmatpush2.msra.mxu0 0.0
    %521 = vmatprep.subr.mxu0 0.0
    %522 = vmatpush2.msra.mxu0 0.0
    %523 = vmatprep.subr.mxu0 0.0
    %524 = vmatpush2.msra.mxu0 0.0
    %525 = vmatprep.subr.mxu0 0.0
    %526 = vmatpush2.msra.mxu0 0.0
    %527 = vmatprep.subr.mxu0 0.0
    %528 = vmatpush2.msra.mxu0 0.0
    %529 = vmatprep.subr.mxu0 0.0
    %530 = vmatpush2.msra.mxu0 0.0
    %531 = vmatprep.subr.mxu0 0.0
    %532 = vmatpush2.msra.mxu0 0.0
    %533 = vmatprep.subr.mxu0 0.0
    %534 = vmatpush2.msra.mxu0 0.0
    %535 = vmatprep.subr.mxu0 0.0
    %536 = vmatpush2.msra.mxu0 0.0
    %537 = vmatprep.subr.mxu0 0.0
    %538 = vmatpush2.msra.mxu0 0.0
    %539 = vmatprep.subr.mxu0 0.0
    %540 = vmatpush2.msra.mxu0 0.0
    %541 = vmatprep.subr.mxu0 0.0
    %542 = vmatpush2.msra.mxu0 0.0
    %543 = vmatprep.subr.mxu0 0.0
    %544 = vmatpush2.msra.mxu0 0.0
    %545 = vmatprep.mubr.f32.mxu0 0.0
    %546 = vmatmul.mubr.f32.gmra.mxu0 %v476
    %v547 = vpop.f32.mrf.mxu0
    %v548 = vadd.f32 %v227, %v547
    %v549 = vpop.f32.mrf.mxu0
    %550 = vmatprep.mubr.f32.mxu0 0.0
    %551 = vmatmul.mubr.f32.gmra.mxu0 %v479
    %v552 = vpop.f32.mrf.mxu0
    %v553 = vadd.f32 %v227, %v552
    %v554 = vpop.f32.mrf.mxu0
    %555 = vdwg.mxu0
    %s556 = scalar_lea.vmem [#allocation5], 16
    %557 = vst.msk [vmem:[%s556] sm:$0xff] %vm131, %v548
    %558 = vst.msk [vmem:[%s556 + $0x8] sm:$0xff] %vm131, %v553
    %s559 = scalar_lea.vmem [#allocation2], 32
    %v560 = vld [vmem:[%s559] sm:$0xff]
    %v561 = vld [vmem:[%s559 + $0x8] sm:$0xff]
    %562 = vmatprep.subr.mxu0 0.0
    %563 = vmatpush1.msra.mxu0 0.0
    %564 = vmatprep.subr.mxu0 0.0
    %565 = vmatpush1.msra.mxu0 0.0
    %566 = vmatprep.subr.mxu0 0.0
    %567 = vmatpush1.msra.mxu0 0.0
    %568 = vmatprep.subr.mxu0 0.0
    %569 = vmatpush1.msra.mxu0 0.0
    %570 = vmatprep.subr.mxu0 0.0
    %571 = vmatpush1.msra.mxu0 0.0
    %572 = vmatprep.subr.mxu0 0.0
    %573 = vmatpush1.msra.mxu0 0.0
    %574 = vmatprep.subr.mxu0 0.0
    %575 = vmatpush1.msra.mxu0 0.0
    %576 = vmatprep.subr.mxu0 0.0
    %577 = vmatpush1.msra.mxu0 0.0
    %578 = vmatprep.subr.mxu0 0.0
    %579 = vmatpush1.msra.mxu0 0.0
    %580 = vmatprep.subr.mxu0 0.0
    %581 = vmatpush1.msra.mxu0 0.0
    %582 = vmatprep.subr.mxu0 0.0
    %583 = vmatpush1.msra.mxu0 0.0
    %584 = vmatprep.subr.mxu0 0.0
    %585 = vmatpush1.msra.mxu0 0.0
    %586 = vmatprep.subr.mxu0 0.0
    %587 = vmatpush1.msra.mxu0 %v43
    %588 = vmatprep.subr.mxu0 0.0
    %589 = vmatpush1.msra.mxu0 %v42
    %590 = vmatprep.subr.mxu0 0.0
    %591 = vmatpush1.msra.mxu0 %v41
    %592 = vmatprep.subr.mxu0 0.0
    %593 = vmatpush1.msra.mxu0 %v40
    %594 = vmatprep.subr.mxu0 0.0
    %595 = vmatpush2.msra.mxu0 0.0
    %596 = vmatprep.subr.mxu0 0.0
    %597 = vmatpush2.msra.mxu0 0.0
    %598 = vmatprep.subr.mxu0 0.0
    %599 = vmatpush2.msra.mxu0 0.0
    %600 = vmatprep.subr.mxu0 0.0
    %601 = vmatpush2.msra.mxu0 0.0
    %602 = vmatprep.subr.mxu0 0.0
    %603 = vmatpush2.msra.mxu0 0.0
    %604 = vmatprep.subr.mxu0 0.0
    %605 = vmatpush2.msra.mxu0 0.0
    %606 = vmatprep.subr.mxu0 0.0
    %607 = vmatpush2.msra.mxu0 0.0
    %608 = vmatprep.subr.mxu0 0.0
    %609 = vmatpush2.msra.mxu0 0.0
    %610 = vmatprep.subr.mxu0 0.0
    %611 = vmatpush2.msra.mxu0 0.0
    %612 = vmatprep.subr.mxu0 0.0
    %613 = vmatpush2.msra.mxu0 0.0
    %614 = vmatprep.subr.mxu0 0.0
    %615 = vmatpush2.msra.mxu0 0.0
    %616 = vmatprep.subr.mxu0 0.0
    %617 = vmatpush2.msra.mxu0 0.0
    %618 = vmatprep.subr.mxu0 0.0
    %619 = vmatpush2.msra.mxu0 0.0
    %620 = vmatprep.subr.mxu0 0.0
    %621 = vmatpush2.msra.mxu0 0.0
    %622 = vmatprep.subr.mxu0 0.0
    %623 = vmatpush2.msra.mxu0 0.0
    %624 = vmatprep.subr.mxu0 0.0
    %625 = vmatpush2.msra.mxu0 0.0
    %626 = vmatprep.mubr.f32.mxu0 0.0
    %627 = vmatmul.mubr.f32.gmra.mxu0 %v476
    %v628 = vpop.f32.mrf.mxu0
    %v629 = vadd.f32 0.0, %v628
    %v630 = vpop.f32.mrf.mxu0
    %631 = vmatprep.mubr.f32.mxu0 0.0
    %632 = vmatmul.mubr.f32.gmra.mxu0 %v479
    %v633 = vpop.f32.mrf.mxu0
    %v634 = vadd.f32 0.0, %v633
    %v635 = vpop.f32.mrf.mxu0
    %636 = vdwg.mxu0
    %v638 = vsel %vm131, %v560, 0
    %v641 = vsel %vm131, %v561, 0
    %643 = vmatprep.subr.mxu0 0.0
    %644 = vmatpush1.msra.mxu0 0.0
    %645 = vmatprep.subr.mxu0 0.0
    %646 = vmatpush1.msra.mxu0 0.0
    %647 = vmatprep.subr.mxu0 0.0
    %648 = vmatpush1.msra.mxu0 0.0
    %649 = vmatprep.subr.mxu0 0.0
    %650 = vmatpush1.msra.mxu0 0.0
    %651 = vmatprep.subr.mxu0 0.0
    %652 = vmatpush1.msra.mxu0 0.0
    %653 = vmatprep.subr.mxu0 0.0
    %654 = vmatpush1.msra.mxu0 0.0
    %655 = vmatprep.subr.mxu0 0.0
    %656 = vmatpush1.msra.mxu0 0.0
    %657 = vmatprep.subr.mxu0 0.0
    %658 = vmatpush1.msra.mxu0 0.0
    %659 = vmatprep.subr.mxu0 0.0
    %660 = vmatpush1.msra.mxu0 0.0
    %661 = vmatprep.subr.mxu0 0.0
    %662 = vmatpush1.msra.mxu0 0.0
    %663 = vmatprep.subr.mxu0 0.0
    %664 = vmatpush1.msra.mxu0 0.0
    %665 = vmatprep.subr.mxu0 0.0
    %666 = vmatpush1.msra.mxu0 0.0
    %667 = vmatprep.subr.mxu0 0.0
    %668 = vmatpush1.msra.mxu0 0.0
    %669 = vmatprep.subr.mxu0 0.0
    %670 = vmatpush1.msra.mxu0 0.0
    %671 = vmatprep.subr.mxu0 0.0
    %672 = vmatpush1.msra.mxu0 %v39
    %673 = vmatprep.subr.mxu0 0.0
    %674 = vmatpush1.msra.mxu0 %v38
    %675 = vmatprep.subr.mxu0 0.0
    %676 = vmatpush2.msra.mxu0 0.0
    %677 = vmatprep.subr.mxu0 0.0
    %678 = vmatpush2.msra.mxu0 0.0
    %679 = vmatprep.subr.mxu0 0.0
    %680 = vmatpush2.msra.mxu0 0.0
    %681 = vmatprep.subr.mxu0 0.0
    %682 = vmatpush2.msra.mxu0 0.0
    %683 = vmatprep.subr.mxu0 0.0
    %684 = vmatpush2.msra.mxu0 0.0
    %685 = vmatprep.subr.mxu0 0.0
    %686 = vmatpush2.msra.mxu0 0.0
    %687 = vmatprep.subr.mxu0 0.0
    %688 = vmatpush2.msra.mxu0 0.0
    %689 = vmatprep.subr.mxu0 0.0
    %690 = vmatpush2.msra.mxu0 0.0
    %691 = vmatprep.subr.mxu0 0.0
    %692 = vmatpush2.msra.mxu0 0.0
    %693 = vmatprep.subr.mxu0 0.0
    %694 = vmatpush2.msra.mxu0 0.0
    %695 = vmatprep.subr.mxu0 0.0
    %696 = vmatpush2.msra.mxu0 0.0
    %697 = vmatprep.subr.mxu0 0.0
    %698 = vmatpush2.msra.mxu0 0.0
    %699 = vmatprep.subr.mxu0 0.0
    %700 = vmatpush2.msra.mxu0 0.0
    %701 = vmatprep.subr.mxu0 0.0
    %702 = vmatpush2.msra.mxu0 0.0
    %703 = vmatprep.subr.mxu0 0.0
    %704 = vmatpush2.msra.mxu0 0.0
    %705 = vmatprep.subr.mxu0 0.0
    %706 = vmatpush2.msra.mxu0 0.0
    %707 = vmatprep.mubr.f32.mxu0 0.0
    %708 = vmatmul.mubr.f32.gmra.mxu0 %v638
    %v709 = vpop.f32.mrf.mxu0
    %v710 = vadd.f32 %v629, %v709
    %v711 = vpop.f32.mrf.mxu0
    %712 = vmatprep.mubr.f32.mxu0 0.0
    %713 = vmatmul.mubr.f32.gmra.mxu0 %v641
    %v714 = vpop.f32.mrf.mxu0
    %v715 = vadd.f32 %v634, %v714
    %v716 = vpop.f32.mrf.mxu0
    %717 = vdwg.mxu0
    %v718 = vadd.f32 %v710, %v217
    %v719 = vadd.f32 %v715, %v217
    %v720 = vtanh.pop %v718
    %v721 = vtanh.pop %v719
    %v723 = vsel %vm52, %v720, 0
    %v726 = vsel %vm52, %v721, 0
    %728 = vmatprep.subr.mxu0 0.0
    %729 = vmatpush1.msra.mxu0 0.0
    %730 = vmatprep.subr.mxu0 0.0
    %731 = vmatpush1.msra.mxu0 0.0
    %732 = vmatprep.subr.mxu0 0.0
    %733 = vmatpush1.msra.mxu0 0.0
    %734 = vmatprep.subr.mxu0 0.0
    %735 = vmatpush1.msra.mxu0 0.0
    %736 = vmatprep.subr.mxu0 0.0
    %737 = vmatpush1.msra.mxu0 0.0
    %738 = vmatprep.subr.mxu0 0.0
    %739 = vmatpush1.msra.mxu0 0.0
    %740 = vmatprep.subr.mxu0 0.0
    %741 = vmatpush1.msra.mxu0 0.0
    %742 = vmatprep.subr.mxu0 0.0
    %743 = vmatpush1.msra.mxu0 0.0
    %744 = vmatprep.subr.mxu0 0.0
    %745 = vmatpush1.msra.mxu0 0.0
    %746 = vmatprep.subr.mxu0 0.0
    %747 = vmatpush1.msra.mxu0 0.0
    %748 = vmatprep.subr.mxu0 0.0
    %749 = vmatpush1.msra.mxu0 0.0
    %750 = vmatprep.subr.mxu0 0.0
    %751 = vmatpush1.msra.mxu0 0.0
    %752 = vmatprep.subr.mxu0 0.0
    %753 = vmatpush1.msra.mxu0 %v47
    %754 = vmatprep.subr.mxu0 0.0
    %755 = vmatpush1.msra.mxu0 %v46
    %756 = vmatprep.subr.mxu0 0.0
    %757 = vmatpush1.msra.mxu0 %v45
    %758 = vmatprep.subr.mxu0 0.0
    %759 = vmatpush1.msra.mxu0 %v44
    %760 = vmatprep.subr.mxu0 0.0
    %761 = vmatpush2.msra.mxu0 0.0
    %762 = vmatprep.subr.mxu0 0.0
    %763 = vmatpush2.msra.mxu0 0.0
    %764 = vmatprep.subr.mxu0 0.0
    %765 = vmatpush2.msra.mxu0 0.0
    %766 = vmatprep.subr.mxu0 0.0
    %767 = vmatpush2.msra.mxu0 0.0
    %768 = vmatprep.subr.mxu0 0.0
    %769 = vmatpush2.msra.mxu0 0.0
    %770 = vmatprep.subr.mxu0 0.0
    %771 = vmatpush2.msra.mxu0 0.0
    %772 = vmatprep.subr.mxu0 0.0
    %773 = vmatpush2.msra.mxu0 0.0
    %774 = vmatprep.subr.mxu0 0.0
    %775 = vmatpush2.msra.mxu0 0.0
    %776 = vmatprep.subr.mxu0 0.0
    %777 = vmatpush2.msra.mxu0 0.0
    %778 = vmatprep.subr.mxu0 0.0
    %779 = vmatpush2.msra.mxu0 0.0
    %780 = vmatprep.subr.mxu0 0.0
    %781 = vmatpush2.msra.mxu0 0.0
    %782 = vmatprep.subr.mxu0 0.0
    %783 = vmatpush2.msra.mxu0 0.0
    %784 = vmatprep.subr.mxu0 0.0
    %785 = vmatpush2.msra.mxu0 0.0
    %786 = vmatprep.subr.mxu0 0.0
    %787 = vmatpush2.msra.mxu0 0.0
    %788 = vmatprep.subr.mxu0 0.0
    %789 = vmatpush2.msra.mxu0 0.0
    %790 = vmatprep.subr.mxu0 0.0
    %791 = vmatpush2.msra.mxu0 0.0
    %792 = vmatprep.mubr.f32.mxu0 0.0
    %793 = vmatmul.mubr.f32.gmra.mxu0 %v723
    %v794 = vpop.f32.mrf.mxu0
    %v795 = vadd.f32 %v227, %v794
    %v796 = vpop.f32.mrf.mxu0
    %797 = vmatprep.mubr.f32.mxu0 0.0
    %798 = vmatmul.mubr.f32.gmra.mxu0 %v726
    %v799 = vpop.f32.mrf.mxu0
    %v800 = vadd.f32 %v227, %v799
    %v801 = vpop.f32.mrf.mxu0
    %802 = vdwg.mxu0
    %s803 = scalar_lea.vmem [#allocation5], 32
    %804 = vst.msk [vmem:[%s803] sm:$0xff] %vm131, %v795
    %805 = vst.msk [vmem:[%s803 + $0x8] sm:$0xff] %vm131, %v800
    %s806 = scalar_lea.vmem [#allocation2], 48
    %v807 = vld [vmem:[%s806] sm:$0xff]
    %v808 = vld [vmem:[%s806 + $0x8] sm:$0xff]
    %809 = vmatprep.subr.mxu0 0.0
    %810 = vmatpush1.msra.mxu0 0.0
    %811 = vmatprep.subr.mxu0 0.0
    %812 = vmatpush1.msra.mxu0 0.0
    %813 = vmatprep.subr.mxu0 0.0
    %814 = vmatpush1.msra.mxu0 0.0
    %815 = vmatprep.subr.mxu0 0.0
    %816 = vmatpush1.msra.mxu0 0.0
    %817 = vmatprep.subr.mxu0 0.0
    %818 = vmatpush1.msra.mxu0 0.0
    %819 = vmatprep.subr.mxu0 0.0
    %820 = vmatpush1.msra.mxu0 0.0
    %821 = vmatprep.subr.mxu0 0.0
    %822 = vmatpush1.msra.mxu0 0.0
    %823 = vmatprep.subr.mxu0 0.0
    %824 = vmatpush1.msra.mxu0 0.0
    %825 = vmatprep.subr.mxu0 0.0
    %826 = vmatpush1.msra.mxu0 0.0
    %827 = vmatprep.subr.mxu0 0.0
    %828 = vmatpush1.msra.mxu0 0.0
    %829 = vmatprep.subr.mxu0 0.0
    %830 = vmatpush1.msra.mxu0 0.0
    %831 = vmatprep.subr.mxu0 0.0
    %832 = vmatpush1.msra.mxu0 0.0
    %833 = vmatprep.subr.mxu0 0.0
    %834 = vmatpush1.msra.mxu0 %v43
    %835 = vmatprep.subr.mxu0 0.0
    %836 = vmatpush1.msra.mxu0 %v42
    %837 = vmatprep.subr.mxu0 0.0
    %838 = vmatpush1.msra.mxu0 %v41
    %839 = vmatprep.subr.mxu0 0.0
    %840 = vmatpush1.msra.mxu0 %v40
    %841 = vmatprep.subr.mxu0 0.0
    %842 = vmatpush2.msra.mxu0 0.0
    %843 = vmatprep.subr.mxu0 0.0
    %844 = vmatpush2.msra.mxu0 0.0
    %845 = vmatprep.subr.mxu0 0.0
    %846 = vmatpush2.msra.mxu0 0.0
    %847 = vmatprep.subr.mxu0 0.0
    %848 = vmatpush2.msra.mxu0 0.0
    %849 = vmatprep.subr.mxu0 0.0
    %850 = vmatpush2.msra.mxu0 0.0
    %851 = vmatprep.subr.mxu0 0.0
    %852 = vmatpush2.msra.mxu0 0.0
    %853 = vmatprep.subr.mxu0 0.0
    %854 = vmatpush2.msra.mxu0 0.0
    %855 = vmatprep.subr.mxu0 0.0
    %856 = vmatpush2.msra.mxu0 0.0
    %857 = vmatprep.subr.mxu0 0.0
    %858 = vmatpush2.msra.mxu0 0.0
    %859 = vmatprep.subr.mxu0 0.0
    %860 = vmatpush2.msra.mxu0 0.0
    %861 = vmatprep.subr.mxu0 0.0
    %862 = vmatpush2.msra.mxu0 0.0
    %863 = vmatprep.subr.mxu0 0.0
    %864 = vmatpush2.msra.mxu0 0.0
    %865 = vmatprep.subr.mxu0 0.0
    %866 = vmatpush2.msra.mxu0 0.0
    %867 = vmatprep.subr.mxu0 0.0
    %868 = vmatpush2.msra.mxu0 0.0
    %869 = vmatprep.subr.mxu0 0.0
    %870 = vmatpush2.msra.mxu0 0.0
    %871 = vmatprep.subr.mxu0 0.0
    %872 = vmatpush2.msra.mxu0 0.0
    %873 = vmatprep.mubr.f32.mxu0 0.0
    %874 = vmatmul.mubr.f32.gmra.mxu0 %v723
    %v875 = vpop.f32.mrf.mxu0
    %v876 = vadd.f32 0.0, %v875
    %v877 = vpop.f32.mrf.mxu0
    %878 = vmatprep.mubr.f32.mxu0 0.0
    %879 = vmatmul.mubr.f32.gmra.mxu0 %v726
    %v880 = vpop.f32.mrf.mxu0
    %v881 = vadd.f32 0.0, %v880
    %v882 = vpop.f32.mrf.mxu0
    %883 = vdwg.mxu0
    %v885 = vsel %vm131, %v807, 0
    %v888 = vsel %vm131, %v808, 0
    %890 = vmatprep.subr.mxu0 0.0
    %891 = vmatpush1.msra.mxu0 0.0
    %892 = vmatprep.subr.mxu0 0.0
    %893 = vmatpush1.msra.mxu0 0.0
    %894 = vmatprep.subr.mxu0 0.0
    %895 = vmatpush1.msra.mxu0 0.0
    %896 = vmatprep.subr.mxu0 0.0
    %897 = vmatpush1.msra.mxu0 0.0
    %898 = vmatprep.subr.mxu0 0.0
    %899 = vmatpush1.msra.mxu0 0.0
    %900 = vmatprep.subr.mxu0 0.0
    %901 = vmatpush1.msra.mxu0 0.0
    %902 = vmatprep.subr.mxu0 0.0
    %903 = vmatpush1.msra.mxu0 0.0
    %904 = vmatprep.subr.mxu0 0.0
    %905 = vmatpush1.msra.mxu0 0.0
    %906 = vmatprep.subr.mxu0 0.0
    %907 = vmatpush1.msra.mxu0 0.0
    %908 = vmatprep.subr.mxu0 0.0
    %909 = vmatpush1.msra.mxu0 0.0
    %910 = vmatprep.subr.mxu0 0.0
    %911 = vmatpush1.msra.mxu0 0.0
    %912 = vmatprep.subr.mxu0 0.0
    %913 = vmatpush1.msra.mxu0 0.0
    %914 = vmatprep.subr.mxu0 0.0
    %915 = vmatpush1.msra.mxu0 0.0
    %916 = vmatprep.subr.mxu0 0.0
    %917 = vmatpush1.msra.mxu0 0.0
    %918 = vmatprep.subr.mxu0 0.0
    %919 = vmatpush1.msra.mxu0 %v39
    %920 = vmatprep.subr.mxu0 0.0
    %921 = vmatpush1.msra.mxu0 %v38
    %922 = vmatprep.subr.mxu0 0.0
    %923 = vmatpush2.msra.mxu0 0.0
    %924 = vmatprep.subr.mxu0 0.0
    %925 = vmatpush2.msra.mxu0 0.0
    %926 = vmatprep.subr.mxu0 0.0
    %927 = vmatpush2.msra.mxu0 0.0
    %928 = vmatprep.subr.mxu0 0.0
    %929 = vmatpush2.msra.mxu0 0.0
    %930 = vmatprep.subr.mxu0 0.0
    %931 = vmatpush2.msra.mxu0 0.0
    %932 = vmatprep.subr.mxu0 0.0
    %933 = vmatpush2.msra.mxu0 0.0
    %934 = vmatprep.subr.mxu0 0.0
    %935 = vmatpush2.msra.mxu0 0.0
    %936 = vmatprep.subr.mxu0 0.0
    %937 = vmatpush2.msra.mxu0 0.0
    %938 = vmatprep.subr.mxu0 0.0
    %939 = vmatpush2.msra.mxu0 0.0
    %940 = vmatprep.subr.mxu0 0.0
    %941 = vmatpush2.msra.mxu0 0.0
    %942 = vmatprep.subr.mxu0 0.0
    %943 = vmatpush2.msra.mxu0 0.0
    %944 = vmatprep.subr.mxu0 0.0
    %945 = vmatpush2.msra.mxu0 0.0
    %946 = vmatprep.subr.mxu0 0.0
    %947 = vmatpush2.msra.mxu0 0.0
    %948 = vmatprep.subr.mxu0 0.0
    %949 = vmatpush2.msra.mxu0 0.0
    %950 = vmatprep.subr.mxu0 0.0
    %951 = vmatpush2.msra.mxu0 0.0
    %952 = vmatprep.subr.mxu0 0.0
    %953 = vmatpush2.msra.mxu0 0.0
    %954 = vmatprep.mubr.f32.mxu0 0.0
    %955 = vmatmul.mubr.f32.gmra.mxu0 %v885
    %v956 = vpop.f32.mrf.mxu0
    %v957 = vadd.f32 %v876, %v956
    %v958 = vpop.f32.mrf.mxu0
    %959 = vmatprep.mubr.f32.mxu0 0.0
    %960 = vmatmul.mubr.f32.gmra.mxu0 %v888
    %v961 = vpop.f32.mrf.mxu0
    %v962 = vadd.f32 %v881, %v961
    %v963 = vpop.f32.mrf.mxu0
    %964 = vdwg.mxu0
    %v965 = vadd.f32 %v957, %v217
    %v966 = vadd.f32 %v962, %v217
    %v967 = vtanh.pop %v965
    %v968 = vtanh.pop %v966
    %v970 = vsel %vm52, %v967, 0
    %v973 = vsel %vm52, %v968, 0
    %975 = vmatprep.subr.mxu0 0.0
    %976 = vmatpush1.msra.mxu0 0.0
    %977 = vmatprep.subr.mxu0 0.0
    %978 = vmatpush1.msra.mxu0 0.0
    %979 = vmatprep.subr.mxu0 0.0
    %980 = vmatpush1.msra.mxu0 0.0
    %981 = vmatprep.subr.mxu0 0.0
    %982 = vmatpush1.msra.mxu0 0.0
    %983 = vmatprep.subr.mxu0 0.0
    %984 = vmatpush1.msra.mxu0 0.0
    %985 = vmatprep.subr.mxu0 0.0
    %986 = vmatpush1.msra.mxu0 0.0
    %987 = vmatprep.subr.mxu0 0.0
    %988 = vmatpush1.msra.mxu0 0.0
    %989 = vmatprep.subr.mxu0 0.0
    %990 = vmatpush1.msra.mxu0 0.0
    %991 = vmatprep.subr.mxu0 0.0
    %992 = vmatpush1.msra.mxu0 0.0
    %993 = vmatprep.subr.mxu0 0.0
    %994 = vmatpush1.msra.mxu0 0.0
    %995 = vmatprep.subr.mxu0 0.0
    %996 = vmatpush1.msra.mxu0 0.0
    %997 = vmatprep.subr.mxu0 0.0
    %998 = vmatpush1.msra.mxu0 0.0
    %999 = vmatprep.subr.mxu0 0.0
    %1000 = vmatpush1.msra.mxu0 %v47
    %1001 = vmatprep.subr.mxu0 0.0
    %1002 = vmatpush1.msra.mxu0 %v46
    %1003 = vmatprep.subr.mxu0 0.0
    %1004 = vmatpush1.msra.mxu0 %v45
    %1005 = vmatprep.subr.mxu0 0.0
    %1006 = vmatpush1.msra.mxu0 %v44
    %1007 = vmatprep.subr.mxu0 0.0
    %1008 = vmatpush2.msra.mxu0 0.0
    %1009 = vmatprep.subr.mxu0 0.0
    %1010 = vmatpush2.msra.mxu0 0.0
    %1011 = vmatprep.subr.mxu0 0.0
    %1012 = vmatpush2.msra.mxu0 0.0
    %1013 = vmatprep.subr.mxu0 0.0
    %1014 = vmatpush2.msra.mxu0 0.0
    %1015 = vmatprep.subr.mxu0 0.0
    %1016 = vmatpush2.msra.mxu0 0.0
    %1017 = vmatprep.subr.mxu0 0.0
    %1018 = vmatpush2.msra.mxu0 0.0
    %1019 = vmatprep.subr.mxu0 0.0
    %1020 = vmatpush2.msra.mxu0 0.0
    %1021 = vmatprep.subr.mxu0 0.0
    %1022 = vmatpush2.msra.mxu0 0.0
    %1023 = vmatprep.subr.mxu0 0.0
    %1024 = vmatpush2.msra.mxu0 0.0
    %1025 = vmatprep.subr.mxu0 0.0
    %1026 = vmatpush2.msra.mxu0 0.0
    %1027 = vmatprep.subr.mxu0 0.0
    %1028 = vmatpush2.msra.mxu0 0.0
    %1029 = vmatprep.subr.mxu0 0.0
    %1030 = vmatpush2.msra.mxu0 0.0
    %1031 = vmatprep.subr.mxu0 0.0
    %1032 = vmatpush2.msra.mxu0 0.0
    %1033 = vmatprep.subr.mxu0 0.0
    %1034 = vmatpush2.msra.mxu0 0.0
    %1035 = vmatprep.subr.mxu0 0.0
    %1036 = vmatpush2.msra.mxu0 0.0
    %1037 = vmatprep.subr.mxu0 0.0
    %1038 = vmatpush2.msra.mxu0 0.0
    %1039 = vmatprep.mubr.f32.mxu0 0.0
    %1040 = vmatmul.mubr.f32.gmra.mxu0 %v970
    %v1041 = vpop.f32.mrf.mxu0
    %v1042 = vadd.f32 %v227, %v1041
    %v1043 = vpop.f32.mrf.mxu0
    %1044 = vmatprep.mubr.f32.mxu0 0.0
    %1045 = vmatmul.mubr.f32.gmra.mxu0 %v973
    %v1046 = vpop.f32.mrf.mxu0
    %v1047 = vadd.f32 %v227, %v1046
    %v1048 = vpop.f32.mrf.mxu0
    %1049 = vdwg.mxu0
    %s1050 = scalar_lea.vmem [#allocation5], 48
    %1051 = vst.msk [vmem:[%s1050] sm:$0xff] %vm131, %v1042
    %1052 = vst.msk [vmem:[%s1050 + $0x8] sm:$0xff] %vm131, %v1047
    %s1053 = scalar_lea.vmem [#allocation2], 64
    %v1054 = vld [vmem:[%s1053] sm:$0xff]
    %v1055 = vld [vmem:[%s1053 + $0x8] sm:$0xff]
    %1056 = vmatprep.subr.mxu0 0.0
    %1057 = vmatpush1.msra.mxu0 0.0
    %1058 = vmatprep.subr.mxu0 0.0
    %1059 = vmatpush1.msra.mxu0 0.0
    %1060 = vmatprep.subr.mxu0 0.0
    %1061 = vmatpush1.msra.mxu0 0.0
    %1062 = vmatprep.subr.mxu0 0.0
    %1063 = vmatpush1.msra.mxu0 0.0
    %1064 = vmatprep.subr.mxu0 0.0
    %1065 = vmatpush1.msra.mxu0 0.0
    %1066 = vmatprep.subr.mxu0 0.0
    %1067 = vmatpush1.msra.mxu0 0.0
    %1068 = vmatprep.subr.mxu0 0.0
    %1069 = vmatpush1.msra.mxu0 0.0
    %1070 = vmatprep.subr.mxu0 0.0
    %1071 = vmatpush1.msra.mxu0 0.0
    %1072 = vmatprep.subr.mxu0 0.0
    %1073 = vmatpush1.msra.mxu0 0.0
    %1074 = vmatprep.subr.mxu0 0.0
    %1075 = vmatpush1.msra.mxu0 0.0
    %1076 = vmatprep.subr.mxu0 0.0
    %1077 = vmatpush1.msra.mxu0 0.0
    %1078 = vmatprep.subr.mxu0 0.0
    %1079 = vmatpush1.msra.mxu0 0.0
    %1080 = vmatprep.subr.mxu0 0.0
    %1081 = vmatpush1.msra.mxu0 %v43
    %1082 = vmatprep.subr.mxu0 0.0
    %1083 = vmatpush1.msra.mxu0 %v42
    %1084 = vmatprep.subr.mxu0 0.0
    %1085 = vmatpush1.msra.mxu0 %v41
    %1086 = vmatprep.subr.mxu0 0.0
    %1087 = vmatpush1.msra.mxu0 %v40
    %1088 = vmatprep.subr.mxu0 0.0
    %1089 = vmatpush2.msra.mxu0 0.0
    %1090 = vmatprep.subr.mxu0 0.0
    %1091 = vmatpush2.msra.mxu0 0.0
    %1092 = vmatprep.subr.mxu0 0.0
    %1093 = vmatpush2.msra.mxu0 0.0
    %1094 = vmatprep.subr.mxu0 0.0
    %1095 = vmatpush2.msra.mxu0 0.0
    %1096 = vmatprep.subr.mxu0 0.0
    %1097 = vmatpush2.msra.mxu0 0.0
    %1098 = vmatprep.subr.mxu0 0.0
    %1099 = vmatpush2.msra.mxu0 0.0
    %1100 = vmatprep.subr.mxu0 0.0
    %1101 = vmatpush2.msra.mxu0 0.0
    %1102 = vmatprep.subr.mxu0 0.0
    %1103 = vmatpush2.msra.mxu0 0.0
    %1104 = vmatprep.subr.mxu0 0.0
    %1105 = vmatpush2.msra.mxu0 0.0
    %1106 = vmatprep.subr.mxu0 0.0
    %1107 = vmatpush2.msra.mxu0 0.0
    %1108 = vmatprep.subr.mxu0 0.0
    %1109 = vmatpush2.msra.mxu0 0.0
    %1110 = vmatprep.subr.mxu0 0.0
    %1111 = vmatpush2.msra.mxu0 0.0
    %1112 = vmatprep.subr.mxu0 0.0
    %1113 = vmatpush2.msra.mxu0 0.0
    %1114 = vmatprep.subr.mxu0 0.0
    %1115 = vmatpush2.msra.mxu0 0.0
    %1116 = vmatprep.subr.mxu0 0.0
    %1117 = vmatpush2.msra.mxu0 0.0
    %1118 = vmatprep.subr.mxu0 0.0
    %1119 = vmatpush2.msra.mxu0 0.0
    %1120 = vmatprep.mubr.f32.mxu0 0.0
    %1121 = vmatmul.mubr.f32.gmra.mxu0 %v970
    %v1122 = vpop.f32.mrf.mxu0
    %v1123 = vadd.f32 0.0, %v1122
    %v1124 = vpop.f32.mrf.mxu0
    %1125 = vmatprep.mubr.f32.mxu0 0.0
    %1126 = vmatmul.mubr.f32.gmra.mxu0 %v973
    %v1127 = vpop.f32.mrf.mxu0
    %v1128 = vadd.f32 0.0, %v1127
    %v1129 = vpop.f32.mrf.mxu0
    %1130 = vdwg.mxu0
    %v1132 = vsel %vm131, %v1054, 0
    %v1135 = vsel %vm131, %v1055, 0
    %1137 = vmatprep.subr.mxu0 0.0
    %1138 = vmatpush1.msra.mxu0 0.0
    %1139 = vmatprep.subr.mxu0 0.0
    %1140 = vmatpush1.msra.mxu0 0.0
    %1141 = vmatprep.subr.mxu0 0.0
    %1142 = vmatpush1.msra.mxu0 0.0
    %1143 = vmatprep.subr.mxu0 0.0
    %1144 = vmatpush1.msra.mxu0 0.0
    %1145 = vmatprep.subr.mxu0 0.0
    %1146 = vmatpush1.msra.mxu0 0.0
    %1147 = vmatprep.subr.mxu0 0.0
    %1148 = vmatpush1.msra.mxu0 0.0
    %1149 = vmatprep.subr.mxu0 0.0
    %1150 = vmatpush1.msra.mxu0 0.0
    %1151 = vmatprep.subr.mxu0 0.0
    %1152 = vmatpush1.msra.mxu0 0.0
    %1153 = vmatprep.subr.mxu0 0.0
    %1154 = vmatpush1.msra.mxu0 0.0
    %1155 = vmatprep.subr.mxu0 0.0
    %1156 = vmatpush1.msra.mxu0 0.0
    %1157 = vmatprep.subr.mxu0 0.0
    %1158 = vmatpush1.msra.mxu0 0.0
    %1159 = vmatprep.subr.mxu0 0.0
    %1160 = vmatpush1.msra.mxu0 0.0
    %1161 = vmatprep.subr.mxu0 0.0
    %1162 = vmatpush1.msra.mxu0 0.0
    %1163 = vmatprep.subr.mxu0 0.0
    %1164 = vmatpush1.msra.mxu0 0.0
    %1165 = vmatprep.subr.mxu0 0.0
    %1166 = vmatpush1.msra.mxu0 %v39
    %1167 = vmatprep.subr.mxu0 0.0
    %1168 = vmatpush1.msra.mxu0 %v38
    %1169 = vmatprep.subr.mxu0 0.0
    %1170 = vmatpush2.msra.mxu0 0.0
    %1171 = vmatprep.subr.mxu0 0.0
    %1172 = vmatpush2.msra.mxu0 0.0
    %1173 = vmatprep.subr.mxu0 0.0
    %1174 = vmatpush2.msra.mxu0 0.0
    %1175 = vmatprep.subr.mxu0 0.0
    %1176 = vmatpush2.msra.mxu0 0.0
    %1177 = vmatprep.subr.mxu0 0.0
    %1178 = vmatpush2.msra.mxu0 0.0
    %1179 = vmatprep.subr.mxu0 0.0
    %1180 = vmatpush2.msra.mxu0 0.0
    %1181 = vmatprep.subr.mxu0 0.0
    %1182 = vmatpush2.msra.mxu0 0.0
    %1183 = vmatprep.subr.mxu0 0.0
    %1184 = vmatpush2.msra.mxu0 0.0
    %1185 = vmatprep.subr.mxu0 0.0
    %1186 = vmatpush2.msra.mxu0 0.0
    %1187 = vmatprep.subr.mxu0 0.0
    %1188 = vmatpush2.msra.mxu0 0.0
    %1189 = vmatprep.subr.mxu0 0.0
    %1190 = vmatpush2.msra.mxu0 0.0
    %1191 = vmatprep.subr.mxu0 0.0
    %1192 = vmatpush2.msra.mxu0 0.0
    %1193 = vmatprep.subr.mxu0 0.0
    %1194 = vmatpush2.msra.mxu0 0.0
    %1195 = vmatprep.subr.mxu0 0.0
    %1196 = vmatpush2.msra.mxu0 0.0
    %1197 = vmatprep.subr.mxu0 0.0
    %1198 = vmatpush2.msra.mxu0 0.0
    %1199 = vmatprep.subr.mxu0 0.0
    %1200 = vmatpush2.msra.mxu0 0.0
    %1201 = vmatprep.mubr.f32.mxu0 0.0
    %1202 = vmatmul.mubr.f32.gmra.mxu0 %v1132
    %v1203 = vpop.f32.mrf.mxu0
    %v1204 = vadd.f32 %v1123, %v1203
    %v1205 = vpop.f32.mrf.mxu0
    %1206 = vmatprep.mubr.f32.mxu0 0.0
    %1207 = vmatmul.mubr.f32.gmra.mxu0 %v1135
    %v1208 = vpop.f32.mrf.mxu0
    %v1209 = vadd.f32 %v1128, %v1208
    %v1210 = vpop.f32.mrf.mxu0
    %1211 = vdwg.mxu0
    %v1212 = vadd.f32 %v1204, %v217
    %v1213 = vadd.f32 %v1209, %v217
    %v1214 = vtanh.pop %v1212
    %v1215 = vtanh.pop %v1213
    %v1217 = vsel %vm52, %v1214, 0
    %v1220 = vsel %vm52, %v1215, 0
    %1222 = vmatprep.subr.mxu0 0.0
    %1223 = vmatpush1.msra.mxu0 0.0
    %1224 = vmatprep.subr.mxu0 0.0
    %1225 = vmatpush1.msra.mxu0 0.0
    %1226 = vmatprep.subr.mxu0 0.0
    %1227 = vmatpush1.msra.mxu0 0.0
    %1228 = vmatprep.subr.mxu0 0.0
    %1229 = vmatpush1.msra.mxu0 0.0
    %1230 = vmatprep.subr.mxu0 0.0
    %1231 = vmatpush1.msra.mxu0 0.0
    %1232 = vmatprep.subr.mxu0 0.0
    %1233 = vmatpush1.msra.mxu0 0.0
    %1234 = vmatprep.subr.mxu0 0.0
    %1235 = vmatpush1.msra.mxu0 0.0
    %1236 = vmatprep.subr.mxu0 0.0
    %1237 = vmatpush1.msra.mxu0 0.0
    %1238 = vmatprep.subr.mxu0 0.0
    %1239 = vmatpush1.msra.mxu0 0.0
    %1240 = vmatprep.subr.mxu0 0.0
    %1241 = vmatpush1.msra.mxu0 0.0
    %1242 = vmatprep.subr.mxu0 0.0
    %1243 = vmatpush1.msra.mxu0 0.0
    %1244 = vmatprep.subr.mxu0 0.0
    %1245 = vmatpush1.msra.mxu0 0.0
    %1246 = vmatprep.subr.mxu0 0.0
    %1247 = vmatpush1.msra.mxu0 %v47
    %1248 = vmatprep.subr.mxu0 0.0
    %1249 = vmatpush1.msra.mxu0 %v46
    %1250 = vmatprep.subr.mxu0 0.0
    %1251 = vmatpush1.msra.mxu0 %v45
    %1252 = vmatprep.subr.mxu0 0.0
    %1253 = vmatpush1.msra.mxu0 %v44
    %1254 = vmatprep.subr.mxu0 0.0
    %1255 = vmatpush2.msra.mxu0 0.0
    %1256 = vmatprep.subr.mxu0 0.0
    %1257 = vmatpush2.msra.mxu0 0.0
    %1258 = vmatprep.subr.mxu0 0.0
    %1259 = vmatpush2.msra.mxu0 0.0
    %1260 = vmatprep.subr.mxu0 0.0
    %1261 = vmatpush2.msra.mxu0 0.0
    %1262 = vmatprep.subr.mxu0 0.0
    %1263 = vmatpush2.msra.mxu0 0.0
    %1264 = vmatprep.subr.mxu0 0.0
    %1265 = vmatpush2.msra.mxu0 0.0
    %1266 = vmatprep.subr.mxu0 0.0
    %1267 = vmatpush2.msra.mxu0 0.0
    %1268 = vmatprep.subr.mxu0 0.0
    %1269 = vmatpush2.msra.mxu0 0.0
    %1270 = vmatprep.subr.mxu0 0.0
    %1271 = vmatpush2.msra.mxu0 0.0
    %1272 = vmatprep.subr.mxu0 0.0
    %1273 = vmatpush2.msra.mxu0 0.0
    %1274 = vmatprep.subr.mxu0 0.0
    %1275 = vmatpush2.msra.mxu0 0.0
    %1276 = vmatprep.subr.mxu0 0.0
    %1277 = vmatpush2.msra.mxu0 0.0
    %1278 = vmatprep.subr.mxu0 0.0
    %1279 = vmatpush2.msra.mxu0 0.0
    %1280 = vmatprep.subr.mxu0 0.0
    %1281 = vmatpush2.msra.mxu0 0.0
    %1282 = vmatprep.subr.mxu0 0.0
    %1283 = vmatpush2.msra.mxu0 0.0
    %1284 = vmatprep.subr.mxu0 0.0
    %1285 = vmatpush2.msra.mxu0 0.0
    %1286 = vmatprep.mubr.f32.mxu0 0.0
    %1287 = vmatmul.mubr.f32.gmra.mxu0 %v1217
    %v1288 = vpop.f32.mrf.mxu0
    %v1289 = vadd.f32 %v227, %v1288
    %v1290 = vpop.f32.mrf.mxu0
    %1291 = vmatprep.mubr.f32.mxu0 0.0
    %1292 = vmatmul.mubr.f32.gmra.mxu0 %v1220
    %v1293 = vpop.f32.mrf.mxu0
    %v1294 = vadd.f32 %v227, %v1293
    %v1295 = vpop.f32.mrf.mxu0
    %1296 = vdwg.mxu0
    %s1297 = scalar_lea.vmem [#allocation5], 64
    %1298 = vst.msk [vmem:[%s1297] sm:$0xff] %vm131, %v1289
    %1299 = vst.msk [vmem:[%s1297 + $0x8] sm:$0xff] %vm131, %v1294
    %s1300 = scalar_lea.vmem [#allocation2], 80
    %v1301 = vld [vmem:[%s1300] sm:$0xff]
    %v1302 = vld [vmem:[%s1300 + $0x8] sm:$0xff]
    %1303 = vmatprep.subr.mxu0 0.0
    %1304 = vmatpush1.msra.mxu0 0.0
    %1305 = vmatprep.subr.mxu0 0.0
    %1306 = vmatpush1.msra.mxu0 0.0
    %1307 = vmatprep.subr.mxu0 0.0
    %1308 = vmatpush1.msra.mxu0 0.0
    %1309 = vmatprep.subr.mxu0 0.0
    %1310 = vmatpush1.msra.mxu0 0.0
    %1311 = vmatprep.subr.mxu0 0.0
    %1312 = vmatpush1.msra.mxu0 0.0
    %1313 = vmatprep.subr.mxu0 0.0
    %1314 = vmatpush1.msra.mxu0 0.0
    %1315 = vmatprep.subr.mxu0 0.0
    %1316 = vmatpush1.msra.mxu0 0.0
    %1317 = vmatprep.subr.mxu0 0.0
    %1318 = vmatpush1.msra.mxu0 0.0
    %1319 = vmatprep.subr.mxu0 0.0
    %1320 = vmatpush1.msra.mxu0 0.0
    %1321 = vmatprep.subr.mxu0 0.0
    %1322 = vmatpush1.msra.mxu0 0.0
    %1323 = vmatprep.subr.mxu0 0.0
    %1324 = vmatpush1.msra.mxu0 0.0
    %1325 = vmatprep.subr.mxu0 0.0
    %1326 = vmatpush1.msra.mxu0 0.0
    %1327 = vmatprep.subr.mxu0 0.0
    %1328 = vmatpush1.msra.mxu0 %v43
    %1329 = vmatprep.subr.mxu0 0.0
    %1330 = vmatpush1.msra.mxu0 %v42
    %1331 = vmatprep.subr.mxu0 0.0
    %1332 = vmatpush1.msra.mxu0 %v41
    %1333 = vmatprep.subr.mxu0 0.0
    %1334 = vmatpush1.msra.mxu0 %v40
    %1335 = vmatprep.subr.mxu0 0.0
    %1336 = vmatpush2.msra.mxu0 0.0
    %1337 = vmatprep.subr.mxu0 0.0
    %1338 = vmatpush2.msra.mxu0 0.0
    %1339 = vmatprep.subr.mxu0 0.0
    %1340 = vmatpush2.msra.mxu0 0.0
    %1341 = vmatprep.subr.mxu0 0.0
    %1342 = vmatpush2.msra.mxu0 0.0
    %1343 = vmatprep.subr.mxu0 0.0
    %1344 = vmatpush2.msra.mxu0 0.0
    %1345 = vmatprep.subr.mxu0 0.0
    %1346 = vmatpush2.msra.mxu0 0.0
    %1347 = vmatprep.subr.mxu0 0.0
    %1348 = vmatpush2.msra.mxu0 0.0
    %1349 = vmatprep.subr.mxu0 0.0
    %1350 = vmatpush2.msra.mxu0 0.0
    %1351 = vmatprep.subr.mxu0 0.0
    %1352 = vmatpush2.msra.mxu0 0.0
    %1353 = vmatprep.subr.mxu0 0.0
    %1354 = vmatpush2.msra.mxu0 0.0
    %1355 = vmatprep.subr.mxu0 0.0
    %1356 = vmatpush2.msra.mxu0 0.0
    %1357 = vmatprep.subr.mxu0 0.0
    %1358 = vmatpush2.msra.mxu0 0.0
    %1359 = vmatprep.subr.mxu0 0.0
    %1360 = vmatpush2.msra.mxu0 0.0
    %1361 = vmatprep.subr.mxu0 0.0
    %1362 = vmatpush2.msra.mxu0 0.0
    %1363 = vmatprep.subr.mxu0 0.0
    %1364 = vmatpush2.msra.mxu0 0.0
    %1365 = vmatprep.subr.mxu0 0.0
    %1366 = vmatpush2.msra.mxu0 0.0
    %1367 = vmatprep.mubr.f32.mxu0 0.0
    %1368 = vmatmul.mubr.f32.gmra.mxu0 %v1217
    %v1369 = vpop.f32.mrf.mxu0
    %v1370 = vadd.f32 0.0, %v1369
    %v1371 = vpop.f32.mrf.mxu0
    %1372 = vmatprep.mubr.f32.mxu0 0.0
    %1373 = vmatmul.mubr.f32.gmra.mxu0 %v1220
    %v1374 = vpop.f32.mrf.mxu0
    %v1375 = vadd.f32 0.0, %v1374
    %v1376 = vpop.f32.mrf.mxu0
    %1377 = vdwg.mxu0
    %v1379 = vsel %vm131, %v1301, 0
    %v1382 = vsel %vm131, %v1302, 0
    %1384 = vmatprep.subr.mxu0 0.0
    %1385 = vmatpush1.msra.mxu0 0.0
    %1386 = vmatprep.subr.mxu0 0.0
    %1387 = vmatpush1.msra.mxu0 0.0
    %1388 = vmatprep.subr.mxu0 0.0
    %1389 = vmatpush1.msra.mxu0 0.0
    %1390 = vmatprep.subr.mxu0 0.0
    %1391 = vmatpush1.msra.mxu0 0.0
    %1392 = vmatprep.subr.mxu0 0.0
    %1393 = vmatpush1.msra.mxu0 0.0
    %1394 = vmatprep.subr.mxu0 0.0
    %1395 = vmatpush1.msra.mxu0 0.0
    %1396 = vmatprep.subr.mxu0 0.0
    %1397 = vmatpush1.msra.mxu0 0.0
    %1398 = vmatprep.subr.mxu0 0.0
    %1399 = vmatpush1.msra.mxu0 0.0
    %1400 = vmatprep.subr.mxu0 0.0
    %1401 = vmatpush1.msra.mxu0 0.0
    %1402 = vmatprep.subr.mxu0 0.0
    %1403 = vmatpush1.msra.mxu0 0.0
    %1404 = vmatprep.subr.mxu0 0.0
    %1405 = vmatpush1.msra.mxu0 0.0
    %1406 = vmatprep.subr.mxu0 0.0
    %1407 = vmatpush1.msra.mxu0 0.0
    %1408 = vmatprep.subr.mxu0 0.0
    %1409 = vmatpush1.msra.mxu0 0.0
    %1410 = vmatprep.subr.mxu0 0.0
    %1411 = vmatpush1.msra.mxu0 0.0
    %1412 = vmatprep.subr.mxu0 0.0
    %1413 = vmatpush1.msra.mxu0 %v39
    %1414 = vmatprep.subr.mxu0 0.0
    %1415 = vmatpush1.msra.mxu0 %v38
    %1416 = vmatprep.subr.mxu0 0.0
    %1417 = vmatpush2.msra.mxu0 0.0
    %1418 = vmatprep.subr.mxu0 0.0
    %1419 = vmatpush2.msra.mxu0 0.0
    %1420 = vmatprep.subr.mxu0 0.0
    %1421 = vmatpush2.msra.mxu0 0.0
    %1422 = vmatprep.subr.mxu0 0.0
    %1423 = vmatpush2.msra.mxu0 0.0
    %1424 = vmatprep.subr.mxu0 0.0
    %1425 = vmatpush2.msra.mxu0 0.0
    %1426 = vmatprep.subr.mxu0 0.0
    %1427 = vmatpush2.msra.mxu0 0.0
    %1428 = vmatprep.subr.mxu0 0.0
    %1429 = vmatpush2.msra.mxu0 0.0
    %1430 = vmatprep.subr.mxu0 0.0
    %1431 = vmatpush2.msra.mxu0 0.0
    %1432 = vmatprep.subr.mxu0 0.0
    %1433 = vmatpush2.msra.mxu0 0.0
    %1434 = vmatprep.subr.mxu0 0.0
    %1435 = vmatpush2.msra.mxu0 0.0
    %1436 = vmatprep.subr.mxu0 0.0
    %1437 = vmatpush2.msra.mxu0 0.0
    %1438 = vmatprep.subr.mxu0 0.0
    %1439 = vmatpush2.msra.mxu0 0.0
    %1440 = vmatprep.subr.mxu0 0.0
    %1441 = vmatpush2.msra.mxu0 0.0
    %1442 = vmatprep.subr.mxu0 0.0
    %1443 = vmatpush2.msra.mxu0 0.0
    %1444 = vmatprep.subr.mxu0 0.0
    %1445 = vmatpush2.msra.mxu0 0.0
    %1446 = vmatprep.subr.mxu0 0.0
    %1447 = vmatpush2.msra.mxu0 0.0
    %1448 = vmatprep.mubr.f32.mxu0 0.0
    %1449 = vmatmul.mubr.f32.gmra.mxu0 %v1379
    %v1450 = vpop.f32.mrf.mxu0
    %v1451 = vadd.f32 %v1370, %v1450
    %v1452 = vpop.f32.mrf.mxu0
    %1453 = vmatprep.mubr.f32.mxu0 0.0
    %1454 = vmatmul.mubr.f32.gmra.mxu0 %v1382
    %v1455 = vpop.f32.mrf.mxu0
    %v1456 = vadd.f32 %v1375, %v1455
    %v1457 = vpop.f32.mrf.mxu0
    %1458 = vdwg.mxu0
    %v1459 = vadd.f32 %v1451, %v217
    %v1460 = vadd.f32 %v1456, %v217
    %v1461 = vtanh.pop %v1459
    %v1462 = vtanh.pop %v1460
    %v1464 = vsel %vm52, %v1461, 0
    %v1467 = vsel %vm52, %v1462, 0
    %1469 = vmatprep.subr.mxu0 0.0
    %1470 = vmatpush1.msra.mxu0 0.0
    %1471 = vmatprep.subr.mxu0 0.0
    %1472 = vmatpush1.msra.mxu0 0.0
    %1473 = vmatprep.subr.mxu0 0.0
    %1474 = vmatpush1.msra.mxu0 0.0
    %1475 = vmatprep.subr.mxu0 0.0
    %1476 = vmatpush1.msra.mxu0 0.0
    %1477 = vmatprep.subr.mxu0 0.0
    %1478 = vmatpush1.msra.mxu0 0.0
    %1479 = vmatprep.subr.mxu0 0.0
    %1480 = vmatpush1.msra.mxu0 0.0
    %1481 = vmatprep.subr.mxu0 0.0
    %1482 = vmatpush1.msra.mxu0 0.0
    %1483 = vmatprep.subr.mxu0 0.0
    %1484 = vmatpush1.msra.mxu0 0.0
    %1485 = vmatprep.subr.mxu0 0.0
    %1486 = vmatpush1.msra.mxu0 0.0
    %1487 = vmatprep.subr.mxu0 0.0
    %1488 = vmatpush1.msra.mxu0 0.0
    %1489 = vmatprep.subr.mxu0 0.0
    %1490 = vmatpush1.msra.mxu0 0.0
    %1491 = vmatprep.subr.mxu0 0.0
    %1492 = vmatpush1.msra.mxu0 0.0
    %1493 = vmatprep.subr.mxu0 0.0
    %1494 = vmatpush1.msra.mxu0 %v47
    %1495 = vmatprep.subr.mxu0 0.0
    %1496 = vmatpush1.msra.mxu0 %v46
    %1497 = vmatprep.subr.mxu0 0.0
    %1498 = vmatpush1.msra.mxu0 %v45
    %1499 = vmatprep.subr.mxu0 0.0
    %1500 = vmatpush1.msra.mxu0 %v44
    %1501 = vmatprep.subr.mxu0 0.0
    %1502 = vmatpush2.msra.mxu0 0.0
    %1503 = vmatprep.subr.mxu0 0.0
    %1504 = vmatpush2.msra.mxu0 0.0
    %1505 = vmatprep.subr.mxu0 0.0
    %1506 = vmatpush2.msra.mxu0 0.0
    %1507 = vmatprep.subr.mxu0 0.0
    %1508 = vmatpush2.msra.mxu0 0.0
    %1509 = vmatprep.subr.mxu0 0.0
    %1510 = vmatpush2.msra.mxu0 0.0
    %1511 = vmatprep.subr.mxu0 0.0
    %1512 = vmatpush2.msra.mxu0 0.0
    %1513 = vmatprep.subr.mxu0 0.0
    %1514 = vmatpush2.msra.mxu0 0.0
    %1515 = vmatprep.subr.mxu0 0.0
    %1516 = vmatpush2.msra.mxu0 0.0
    %1517 = vmatprep.subr.mxu0 0.0
    %1518 = vmatpush2.msra.mxu0 0.0
    %1519 = vmatprep.subr.mxu0 0.0
    %1520 = vmatpush2.msra.mxu0 0.0
    %1521 = vmatprep.subr.mxu0 0.0
    %1522 = vmatpush2.msra.mxu0 0.0
    %1523 = vmatprep.subr.mxu0 0.0
    %1524 = vmatpush2.msra.mxu0 0.0
    %1525 = vmatprep.subr.mxu0 0.0
    %1526 = vmatpush2.msra.mxu0 0.0
    %1527 = vmatprep.subr.mxu0 0.0
    %1528 = vmatpush2.msra.mxu0 0.0
    %1529 = vmatprep.subr.mxu0 0.0
    %1530 = vmatpush2.msra.mxu0 0.0
    %1531 = vmatprep.subr.mxu0 0.0
    %1532 = vmatpush2.msra.mxu0 0.0
    %1533 = vmatprep.mubr.f32.mxu0 0.0
    %1534 = vmatmul.mubr.f32.gmra.mxu0 %v1464
    %v1535 = vpop.f32.mrf.mxu0
    %v1536 = vadd.f32 %v227, %v1535
    %v1537 = vpop.f32.mrf.mxu0
    %1538 = vmatprep.mubr.f32.mxu0 0.0
    %1539 = vmatmul.mubr.f32.gmra.mxu0 %v1467
    %v1540 = vpop.f32.mrf.mxu0
    %v1541 = vadd.f32 %v227, %v1540
    %v1542 = vpop.f32.mrf.mxu0
    %1543 = vdwg.mxu0
    %s1544 = scalar_lea.vmem [#allocation5], 80
    %1545 = vst.msk [vmem:[%s1544] sm:$0xff] %vm131, %v1536
    %1546 = vst.msk [vmem:[%s1544 + $0x8] sm:$0xff] %vm131, %v1541
    %s1547 = scalar_lea.vmem [#allocation2], 96
    %v1548 = vld [vmem:[%s1547] sm:$0xff]
    %v1549 = vld [vmem:[%s1547 + $0x8] sm:$0xff]
    %1550 = vmatprep.subr.mxu0 0.0
    %1551 = vmatpush1.msra.mxu0 0.0
    %1552 = vmatprep.subr.mxu0 0.0
    %1553 = vmatpush1.msra.mxu0 0.0
    %1554 = vmatprep.subr.mxu0 0.0
    %1555 = vmatpush1.msra.mxu0 0.0
    %1556 = vmatprep.subr.mxu0 0.0
    %1557 = vmatpush1.msra.mxu0 0.0
    %1558 = vmatprep.subr.mxu0 0.0
    %1559 = vmatpush1.msra.mxu0 0.0
    %1560 = vmatprep.subr.mxu0 0.0
    %1561 = vmatpush1.msra.mxu0 0.0
    %1562 = vmatprep.subr.mxu0 0.0
    %1563 = vmatpush1.msra.mxu0 0.0
    %1564 = vmatprep.subr.mxu0 0.0
    %1565 = vmatpush1.msra.mxu0 0.0
    %1566 = vmatprep.subr.mxu0 0.0
    %1567 = vmatpush1.msra.mxu0 0.0
    %1568 = vmatprep.subr.mxu0 0.0
    %1569 = vmatpush1.msra.mxu0 0.0
    %1570 = vmatprep.subr.mxu0 0.0
    %1571 = vmatpush1.msra.mxu0 0.0
    %1572 = vmatprep.subr.mxu0 0.0
    %1573 = vmatpush1.msra.mxu0 0.0
    %1574 = vmatprep.subr.mxu0 0.0
    %1575 = vmatpush1.msra.mxu0 %v43
    %1576 = vmatprep.subr.mxu0 0.0
    %1577 = vmatpush1.msra.mxu0 %v42
    %1578 = vmatprep.subr.mxu0 0.0
    %1579 = vmatpush1.msra.mxu0 %v41
    %1580 = vmatprep.subr.mxu0 0.0
    %1581 = vmatpush1.msra.mxu0 %v40
    %1582 = vmatprep.subr.mxu0 0.0
    %1583 = vmatpush2.msra.mxu0 0.0
    %1584 = vmatprep.subr.mxu0 0.0
    %1585 = vmatpush2.msra.mxu0 0.0
    %1586 = vmatprep.subr.mxu0 0.0
    %1587 = vmatpush2.msra.mxu0 0.0
    %1588 = vmatprep.subr.mxu0 0.0
    %1589 = vmatpush2.msra.mxu0 0.0
    %1590 = vmatprep.subr.mxu0 0.0
    %1591 = vmatpush2.msra.mxu0 0.0
    %1592 = vmatprep.subr.mxu0 0.0
    %1593 = vmatpush2.msra.mxu0 0.0
    %1594 = vmatprep.subr.mxu0 0.0
    %1595 = vmatpush2.msra.mxu0 0.0
    %1596 = vmatprep.subr.mxu0 0.0
    %1597 = vmatpush2.msra.mxu0 0.0
    %1598 = vmatprep.subr.mxu0 0.0
    %1599 = vmatpush2.msra.mxu0 0.0
    %1600 = vmatprep.subr.mxu0 0.0
    %1601 = vmatpush2.msra.mxu0 0.0
    %1602 = vmatprep.subr.mxu0 0.0
    %1603 = vmatpush2.msra.mxu0 0.0
    %1604 = vmatprep.subr.mxu0 0.0
    %1605 = vmatpush2.msra.mxu0 0.0
    %1606 = vmatprep.subr.mxu0 0.0
    %1607 = vmatpush2.msra.mxu0 0.0
    %1608 = vmatprep.subr.mxu0 0.0
    %1609 = vmatpush2.msra.mxu0 0.0
    %1610 = vmatprep.subr.mxu0 0.0
    %1611 = vmatpush2.msra.mxu0 0.0
    %1612 = vmatprep.subr.mxu0 0.0
    %1613 = vmatpush2.msra.mxu0 0.0
    %1614 = vmatprep.mubr.f32.mxu0 0.0
    %1615 = vmatmul.mubr.f32.gmra.mxu0 %v1464
    %v1616 = vpop.f32.mrf.mxu0
    %v1617 = vadd.f32 0.0, %v1616
    %v1618 = vpop.f32.mrf.mxu0
    %1619 = vmatprep.mubr.f32.mxu0 0.0
    %1620 = vmatmul.mubr.f32.gmra.mxu0 %v1467
    %v1621 = vpop.f32.mrf.mxu0
    %v1622 = vadd.f32 0.0, %v1621
    %v1623 = vpop.f32.mrf.mxu0
    %1624 = vdwg.mxu0
    %v1626 = vsel %vm131, %v1548, 0
    %v1629 = vsel %vm131, %v1549, 0
    %1631 = vmatprep.subr.mxu0 0.0
    %1632 = vmatpush1.msra.mxu0 0.0
    %1633 = vmatprep.subr.mxu0 0.0
    %1634 = vmatpush1.msra.mxu0 0.0
    %1635 = vmatprep.subr.mxu0 0.0
    %1636 = vmatpush1.msra.mxu0 0.0
    %1637 = vmatprep.subr.mxu0 0.0
    %1638 = vmatpush1.msra.mxu0 0.0
    %1639 = vmatprep.subr.mxu0 0.0
    %1640 = vmatpush1.msra.mxu0 0.0
    %1641 = vmatprep.subr.mxu0 0.0
    %1642 = vmatpush1.msra.mxu0 0.0
    %1643 = vmatprep.subr.mxu0 0.0
    %1644 = vmatpush1.msra.mxu0 0.0
    %1645 = vmatprep.subr.mxu0 0.0
    %1646 = vmatpush1.msra.mxu0 0.0
    %1647 = vmatprep.subr.mxu0 0.0
    %1648 = vmatpush1.msra.mxu0 0.0
    %1649 = vmatprep.subr.mxu0 0.0
    %1650 = vmatpush1.msra.mxu0 0.0
    %1651 = vmatprep.subr.mxu0 0.0
    %1652 = vmatpush1.msra.mxu0 0.0
    %1653 = vmatprep.subr.mxu0 0.0
    %1654 = vmatpush1.msra.mxu0 0.0
    %1655 = vmatprep.subr.mxu0 0.0
    %1656 = vmatpush1.msra.mxu0 0.0
    %1657 = vmatprep.subr.mxu0 0.0
    %1658 = vmatpush1.msra.mxu0 0.0
    %1659 = vmatprep.subr.mxu0 0.0
    %1660 = vmatpush1.msra.mxu0 %v39
    %1661 = vmatprep.subr.mxu0 0.0
    %1662 = vmatpush1.msra.mxu0 %v38
    %1663 = vmatprep.subr.mxu0 0.0
    %1664 = vmatpush2.msra.mxu0 0.0
    %1665 = vmatprep.subr.mxu0 0.0
    %1666 = vmatpush2.msra.mxu0 0.0
    %1667 = vmatprep.subr.mxu0 0.0
    %1668 = vmatpush2.msra.mxu0 0.0
    %1669 = vmatprep.subr.mxu0 0.0
    %1670 = vmatpush2.msra.mxu0 0.0
    %1671 = vmatprep.subr.mxu0 0.0
    %1672 = vmatpush2.msra.mxu0 0.0
    %1673 = vmatprep.subr.mxu0 0.0
    %1674 = vmatpush2.msra.mxu0 0.0
    %1675 = vmatprep.subr.mxu0 0.0
    %1676 = vmatpush2.msra.mxu0 0.0
    %1677 = vmatprep.subr.mxu0 0.0
    %1678 = vmatpush2.msra.mxu0 0.0
    %1679 = vmatprep.subr.mxu0 0.0
    %1680 = vmatpush2.msra.mxu0 0.0
    %1681 = vmatprep.subr.mxu0 0.0
    %1682 = vmatpush2.msra.mxu0 0.0
    %1683 = vmatprep.subr.mxu0 0.0
    %1684 = vmatpush2.msra.mxu0 0.0
    %1685 = vmatprep.subr.mxu0 0.0
    %1686 = vmatpush2.msra.mxu0 0.0
    %1687 = vmatprep.subr.mxu0 0.0
    %1688 = vmatpush2.msra.mxu0 0.0
    %1689 = vmatprep.subr.mxu0 0.0
    %1690 = vmatpush2.msra.mxu0 0.0
    %1691 = vmatprep.subr.mxu0 0.0
    %1692 = vmatpush2.msra.mxu0 0.0
    %1693 = vmatprep.subr.mxu0 0.0
    %1694 = vmatpush2.msra.mxu0 0.0
    %1695 = vmatprep.mubr.f32.mxu0 0.0
    %1696 = vmatmul.mubr.f32.gmra.mxu0 %v1626
    %v1697 = vpop.f32.mrf.mxu0
    %v1698 = vadd.f32 %v1617, %v1697
    %v1699 = vpop.f32.mrf.mxu0
    %1700 = vmatprep.mubr.f32.mxu0 0.0
    %1701 = vmatmul.mubr.f32.gmra.mxu0 %v1629
    %v1702 = vpop.f32.mrf.mxu0
    %v1703 = vadd.f32 %v1622, %v1702
    %v1704 = vpop.f32.mrf.mxu0
    %1705 = vdwg.mxu0
    %v1706 = vadd.f32 %v1698, %v217
    %v1707 = vadd.f32 %v1703, %v217
    %v1708 = vtanh.pop %v1706
    %v1709 = vtanh.pop %v1707
    %v1711 = vsel %vm52, %v1708, 0
    %v1714 = vsel %vm52, %v1709, 0
    %1716 = vmatprep.subr.mxu0 0.0
    %1717 = vmatpush1.msra.mxu0 0.0
    %1718 = vmatprep.subr.mxu0 0.0
    %1719 = vmatpush1.msra.mxu0 0.0
    %1720 = vmatprep.subr.mxu0 0.0
    %1721 = vmatpush1.msra.mxu0 0.0
    %1722 = vmatprep.subr.mxu0 0.0
    %1723 = vmatpush1.msra.mxu0 0.0
    %1724 = vmatprep.subr.mxu0 0.0
    %1725 = vmatpush1.msra.mxu0 0.0
    %1726 = vmatprep.subr.mxu0 0.0
    %1727 = vmatpush1.msra.mxu0 0.0
    %1728 = vmatprep.subr.mxu0 0.0
    %1729 = vmatpush1.msra.mxu0 0.0
    %1730 = vmatprep.subr.mxu0 0.0
    %1731 = vmatpush1.msra.mxu0 0.0
    %1732 = vmatprep.subr.mxu0 0.0
    %1733 = vmatpush1.msra.mxu0 0.0
    %1734 = vmatprep.subr.mxu0 0.0
    %1735 = vmatpush1.msra.mxu0 0.0
    %1736 = vmatprep.subr.mxu0 0.0
    %1737 = vmatpush1.msra.mxu0 0.0
    %1738 = vmatprep.subr.mxu0 0.0
    %1739 = vmatpush1.msra.mxu0 0.0
    %1740 = vmatprep.subr.mxu0 0.0
    %1741 = vmatpush1.msra.mxu0 %v47
    %1742 = vmatprep.subr.mxu0 0.0
    %1743 = vmatpush1.msra.mxu0 %v46
    %1744 = vmatprep.subr.mxu0 0.0
    %1745 = vmatpush1.msra.mxu0 %v45
    %1746 = vmatprep.subr.mxu0 0.0
    %1747 = vmatpush1.msra.mxu0 %v44
    %1748 = vmatprep.subr.mxu0 0.0
    %1749 = vmatpush2.msra.mxu0 0.0
    %1750 = vmatprep.subr.mxu0 0.0
    %1751 = vmatpush2.msra.mxu0 0.0
    %1752 = vmatprep.subr.mxu0 0.0
    %1753 = vmatpush2.msra.mxu0 0.0
    %1754 = vmatprep.subr.mxu0 0.0
    %1755 = vmatpush2.msra.mxu0 0.0
    %1756 = vmatprep.subr.mxu0 0.0
    %1757 = vmatpush2.msra.mxu0 0.0
    %1758 = vmatprep.subr.mxu0 0.0
    %1759 = vmatpush2.msra.mxu0 0.0
    %1760 = vmatprep.subr.mxu0 0.0
    %1761 = vmatpush2.msra.mxu0 0.0
    %1762 = vmatprep.subr.mxu0 0.0
    %1763 = vmatpush2.msra.mxu0 0.0
    %1764 = vmatprep.subr.mxu0 0.0
    %1765 = vmatpush2.msra.mxu0 0.0
    %1766 = vmatprep.subr.mxu0 0.0
    %1767 = vmatpush2.msra.mxu0 0.0
    %1768 = vmatprep.subr.mxu0 0.0
    %1769 = vmatpush2.msra.mxu0 0.0
    %1770 = vmatprep.subr.mxu0 0.0
    %1771 = vmatpush2.msra.mxu0 0.0
    %1772 = vmatprep.subr.mxu0 0.0
    %1773 = vmatpush2.msra.mxu0 0.0
    %1774 = vmatprep.subr.mxu0 0.0
    %1775 = vmatpush2.msra.mxu0 0.0
    %1776 = vmatprep.subr.mxu0 0.0
    %1777 = vmatpush2.msra.mxu0 0.0
    %1778 = vmatprep.subr.mxu0 0.0
    %1779 = vmatpush2.msra.mxu0 0.0
    %1780 = vmatprep.mubr.f32.mxu0 0.0
    %1781 = vmatmul.mubr.f32.gmra.mxu0 %v1711
    %v1782 = vpop.f32.mrf.mxu0
    %v1783 = vadd.f32 %v227, %v1782
    %v1784 = vpop.f32.mrf.mxu0
    %1785 = vmatprep.mubr.f32.mxu0 0.0
    %1786 = vmatmul.mubr.f32.gmra.mxu0 %v1714
    %v1787 = vpop.f32.mrf.mxu0
    %v1788 = vadd.f32 %v227, %v1787
    %v1789 = vpop.f32.mrf.mxu0
    %1790 = vdwg.mxu0
    %s1791 = scalar_lea.vmem [#allocation5], 96
    %1792 = vst.msk [vmem:[%s1791] sm:$0xff] %vm131, %v1783
    %1793 = vst.msk [vmem:[%s1791 + $0x8] sm:$0xff] %vm131, %v1788
    %s1794 = scalar_lea.vmem [#allocation2], 112
    %v1795 = vld [vmem:[%s1794] sm:$0xff]
    %v1796 = vld [vmem:[%s1794 + $0x8] sm:$0xff]
    %1797 = vmatprep.subr.mxu0 0.0
    %1798 = vmatpush1.msra.mxu0 0.0
    %1799 = vmatprep.subr.mxu0 0.0
    %1800 = vmatpush1.msra.mxu0 0.0
    %1801 = vmatprep.subr.mxu0 0.0
    %1802 = vmatpush1.msra.mxu0 0.0
    %1803 = vmatprep.subr.mxu0 0.0
    %1804 = vmatpush1.msra.mxu0 0.0
    %1805 = vmatprep.subr.mxu0 0.0
    %1806 = vmatpush1.msra.mxu0 0.0
    %1807 = vmatprep.subr.mxu0 0.0
    %1808 = vmatpush1.msra.mxu0 0.0
    %1809 = vmatprep.subr.mxu0 0.0
    %1810 = vmatpush1.msra.mxu0 0.0
    %1811 = vmatprep.subr.mxu0 0.0
    %1812 = vmatpush1.msra.mxu0 0.0
    %1813 = vmatprep.subr.mxu0 0.0
    %1814 = vmatpush1.msra.mxu0 0.0
    %1815 = vmatprep.subr.mxu0 0.0
    %1816 = vmatpush1.msra.mxu0 0.0
    %1817 = vmatprep.subr.mxu0 0.0
    %1818 = vmatpush1.msra.mxu0 0.0
    %1819 = vmatprep.subr.mxu0 0.0
    %1820 = vmatpush1.msra.mxu0 0.0
    %1821 = vmatprep.subr.mxu0 0.0
    %1822 = vmatpush1.msra.mxu0 %v43
    %1823 = vmatprep.subr.mxu0 0.0
    %1824 = vmatpush1.msra.mxu0 %v42
    %1825 = vmatprep.subr.mxu0 0.0
    %1826 = vmatpush1.msra.mxu0 %v41
    %1827 = vmatprep.subr.mxu0 0.0
    %1828 = vmatpush1.msra.mxu0 %v40
    %1829 = vmatprep.subr.mxu0 0.0
    %1830 = vmatpush2.msra.mxu0 0.0
    %1831 = vmatprep.subr.mxu0 0.0
    %1832 = vmatpush2.msra.mxu0 0.0
    %1833 = vmatprep.subr.mxu0 0.0
    %1834 = vmatpush2.msra.mxu0 0.0
    %1835 = vmatprep.subr.mxu0 0.0
    %1836 = vmatpush2.msra.mxu0 0.0
    %1837 = vmatprep.subr.mxu0 0.0
    %1838 = vmatpush2.msra.mxu0 0.0
    %1839 = vmatprep.subr.mxu0 0.0
    %1840 = vmatpush2.msra.mxu0 0.0
    %1841 = vmatprep.subr.mxu0 0.0
    %1842 = vmatpush2.msra.mxu0 0.0
    %1843 = vmatprep.subr.mxu0 0.0
    %1844 = vmatpush2.msra.mxu0 0.0
    %1845 = vmatprep.subr.mxu0 0.0
    %1846 = vmatpush2.msra.mxu0 0.0
    %1847 = vmatprep.subr.mxu0 0.0
    %1848 = vmatpush2.msra.mxu0 0.0
    %1849 = vmatprep.subr.mxu0 0.0
    %1850 = vmatpush2.msra.mxu0 0.0
    %1851 = vmatprep.subr.mxu0 0.0
    %1852 = vmatpush2.msra.mxu0 0.0
    %1853 = vmatprep.subr.mxu0 0.0
    %1854 = vmatpush2.msra.mxu0 0.0
    %1855 = vmatprep.subr.mxu0 0.0
    %1856 = vmatpush2.msra.mxu0 0.0
    %1857 = vmatprep.subr.mxu0 0.0
    %1858 = vmatpush2.msra.mxu0 0.0
    %1859 = vmatprep.subr.mxu0 0.0
    %1860 = vmatpush2.msra.mxu0 0.0
    %1861 = vmatprep.mubr.f32.mxu0 0.0
    %1862 = vmatmul.mubr.f32.gmra.mxu0 %v1711
    %v1863 = vpop.f32.mrf.mxu0
    %v1864 = vadd.f32 0.0, %v1863
    %v1865 = vpop.f32.mrf.mxu0
    %1866 = vmatprep.mubr.f32.mxu0 0.0
    %1867 = vmatmul.mubr.f32.gmra.mxu0 %v1714
    %v1868 = vpop.f32.mrf.mxu0
    %v1869 = vadd.f32 0.0, %v1868
    %v1870 = vpop.f32.mrf.mxu0
    %1871 = vdwg.mxu0
    %v1873 = vsel %vm131, %v1795, 0
    %v1876 = vsel %vm131, %v1796, 0
    %1878 = vmatprep.subr.mxu0 0.0
    %1879 = vmatpush1.msra.mxu0 0.0
    %1880 = vmatprep.subr.mxu0 0.0
    %1881 = vmatpush1.msra.mxu0 0.0
    %1882 = vmatprep.subr.mxu0 0.0
    %1883 = vmatpush1.msra.mxu0 0.0
    %1884 = vmatprep.subr.mxu0 0.0
    %1885 = vmatpush1.msra.mxu0 0.0
    %1886 = vmatprep.subr.mxu0 0.0
    %1887 = vmatpush1.msra.mxu0 0.0
    %1888 = vmatprep.subr.mxu0 0.0
    %1889 = vmatpush1.msra.mxu0 0.0
    %1890 = vmatprep.subr.mxu0 0.0
    %1891 = vmatpush1.msra.mxu0 0.0
    %1892 = vmatprep.subr.mxu0 0.0
    %1893 = vmatpush1.msra.mxu0 0.0
    %1894 = vmatprep.subr.mxu0 0.0
    %1895 = vmatpush1.msra.mxu0 0.0
    %1896 = vmatprep.subr.mxu0 0.0
    %1897 = vmatpush1.msra.mxu0 0.0
    %1898 = vmatprep.subr.mxu0 0.0
    %1899 = vmatpush1.msra.mxu0 0.0
    %1900 = vmatprep.subr.mxu0 0.0
    %1901 = vmatpush1.msra.mxu0 0.0
    %1902 = vmatprep.subr.mxu0 0.0
    %1903 = vmatpush1.msra.mxu0 0.0
    %1904 = vmatprep.subr.mxu0 0.0
    %1905 = vmatpush1.msra.mxu0 0.0
    %1906 = vmatprep.subr.mxu0 0.0
    %1907 = vmatpush1.msra.mxu0 %v39
    %1908 = vmatprep.subr.mxu0 0.0
    %1909 = vmatpush1.msra.mxu0 %v38
    %1910 = vmatprep.subr.mxu0 0.0
    %1911 = vmatpush2.msra.mxu0 0.0
    %1912 = vmatprep.subr.mxu0 0.0
    %1913 = vmatpush2.msra.mxu0 0.0
    %1914 = vmatprep.subr.mxu0 0.0
    %1915 = vmatpush2.msra.mxu0 0.0
    %1916 = vmatprep.subr.mxu0 0.0
    %1917 = vmatpush2.msra.mxu0 0.0
    %1918 = vmatprep.subr.mxu0 0.0
    %1919 = vmatpush2.msra.mxu0 0.0
    %1920 = vmatprep.subr.mxu0 0.0
    %1921 = vmatpush2.msra.mxu0 0.0
    %1922 = vmatprep.subr.mxu0 0.0
    %1923 = vmatpush2.msra.mxu0 0.0
    %1924 = vmatprep.subr.mxu0 0.0
    %1925 = vmatpush2.msra.mxu0 0.0
    %1926 = vmatprep.subr.mxu0 0.0
    %1927 = vmatpush2.msra.mxu0 0.0
    %1928 = vmatprep.subr.mxu0 0.0
    %1929 = vmatpush2.msra.mxu0 0.0
    %1930 = vmatprep.subr.mxu0 0.0
    %1931 = vmatpush2.msra.mxu0 0.0
    %1932 = vmatprep.subr.mxu0 0.0
    %1933 = vmatpush2.msra.mxu0 0.0
    %1934 = vmatprep.subr.mxu0 0.0
    %1935 = vmatpush2.msra.mxu0 0.0
    %1936 = vmatprep.subr.mxu0 0.0
    %1937 = vmatpush2.msra.mxu0 0.0
    %1938 = vmatprep.subr.mxu0 0.0
    %1939 = vmatpush2.msra.mxu0 0.0
    %1940 = vmatprep.subr.mxu0 0.0
    %1941 = vmatpush2.msra.mxu0 0.0
    %1942 = vmatprep.mubr.f32.mxu0 0.0
    %1943 = vmatmul.mubr.f32.gmra.mxu0 %v1873
    %v1944 = vpop.f32.mrf.mxu0
    %v1945 = vadd.f32 %v1864, %v1944
    %v1946 = vpop.f32.mrf.mxu0
    %1947 = vmatprep.mubr.f32.mxu0 0.0
    %1948 = vmatmul.mubr.f32.gmra.mxu0 %v1876
    %v1949 = vpop.f32.mrf.mxu0
    %v1950 = vadd.f32 %v1869, %v1949
    %v1951 = vpop.f32.mrf.mxu0
    %1952 = vdwg.mxu0
    %v1953 = vadd.f32 %v1945, %v217
    %v1954 = vadd.f32 %v1950, %v217
    %v1955 = vtanh.pop %v1953
    %v1956 = vtanh.pop %v1954
    %v1958 = vsel %vm52, %v1955, 0
    %v1961 = vsel %vm52, %v1956, 0
    %1963 = vmatprep.subr.mxu0 0.0
    %1964 = vmatpush1.msra.mxu0 0.0
    %1965 = vmatprep.subr.mxu0 0.0
    %1966 = vmatpush1.msra.mxu0 0.0
    %1967 = vmatprep.subr.mxu0 0.0
    %1968 = vmatpush1.msra.mxu0 0.0
    %1969 = vmatprep.subr.mxu0 0.0
    %1970 = vmatpush1.msra.mxu0 0.0
    %1971 = vmatprep.subr.mxu0 0.0
    %1972 = vmatpush1.msra.mxu0 0.0
    %1973 = vmatprep.subr.mxu0 0.0
    %1974 = vmatpush1.msra.mxu0 0.0
    %1975 = vmatprep.subr.mxu0 0.0
    %1976 = vmatpush1.msra.mxu0 0.0
    %1977 = vmatprep.subr.mxu0 0.0
    %1978 = vmatpush1.msra.mxu0 0.0
    %1979 = vmatprep.subr.mxu0 0.0
    %1980 = vmatpush1.msra.mxu0 0.0
    %1981 = vmatprep.subr.mxu0 0.0
    %1982 = vmatpush1.msra.mxu0 0.0
    %1983 = vmatprep.subr.mxu0 0.0
    %1984 = vmatpush1.msra.mxu0 0.0
    %1985 = vmatprep.subr.mxu0 0.0
    %1986 = vmatpush1.msra.mxu0 0.0
    %1987 = vmatprep.subr.mxu0 0.0
    %1988 = vmatpush1.msra.mxu0 %v47
    %1989 = vmatprep.subr.mxu0 0.0
    %1990 = vmatpush1.msra.mxu0 %v46
    %1991 = vmatprep.subr.mxu0 0.0
    %1992 = vmatpush1.msra.mxu0 %v45
    %1993 = vmatprep.subr.mxu0 0.0
    %1994 = vmatpush1.msra.mxu0 %v44
    %1995 = vmatprep.subr.mxu0 0.0
    %1996 = vmatpush2.msra.mxu0 0.0
    %1997 = vmatprep.subr.mxu0 0.0
    %1998 = vmatpush2.msra.mxu0 0.0
    %1999 = vmatprep.subr.mxu0 0.0
    %2000 = vmatpush2.msra.mxu0 0.0
    %2001 = vmatprep.subr.mxu0 0.0
    %2002 = vmatpush2.msra.mxu0 0.0
    %2003 = vmatprep.subr.mxu0 0.0
    %2004 = vmatpush2.msra.mxu0 0.0
    %2005 = vmatprep.subr.mxu0 0.0
    %2006 = vmatpush2.msra.mxu0 0.0
    %2007 = vmatprep.subr.mxu0 0.0
    %2008 = vmatpush2.msra.mxu0 0.0
    %2009 = vmatprep.subr.mxu0 0.0
    %2010 = vmatpush2.msra.mxu0 0.0
    %2011 = vmatprep.subr.mxu0 0.0
    %2012 = vmatpush2.msra.mxu0 0.0
    %2013 = vmatprep.subr.mxu0 0.0
    %2014 = vmatpush2.msra.mxu0 0.0
    %2015 = vmatprep.subr.mxu0 0.0
    %2016 = vmatpush2.msra.mxu0 0.0
    %2017 = vmatprep.subr.mxu0 0.0
    %2018 = vmatpush2.msra.mxu0 0.0
    %2019 = vmatprep.subr.mxu0 0.0
    %2020 = vmatpush2.msra.mxu0 0.0
    %2021 = vmatprep.subr.mxu0 0.0
    %2022 = vmatpush2.msra.mxu0 0.0
    %2023 = vmatprep.subr.mxu0 0.0
    %2024 = vmatpush2.msra.mxu0 0.0
    %2025 = vmatprep.subr.mxu0 0.0
    %2026 = vmatpush2.msra.mxu0 0.0
    %2027 = vmatprep.mubr.f32.mxu0 0.0
    %2028 = vmatmul.mubr.f32.gmra.mxu0 %v1958
    %v2029 = vpop.f32.mrf.mxu0
    %v2030 = vadd.f32 %v227, %v2029
    %v2031 = vpop.f32.mrf.mxu0
    %2032 = vmatprep.mubr.f32.mxu0 0.0
    %2033 = vmatmul.mubr.f32.gmra.mxu0 %v1961
    %v2034 = vpop.f32.mrf.mxu0
    %v2035 = vadd.f32 %v227, %v2034
    %v2036 = vpop.f32.mrf.mxu0
    %2037 = vdwg.mxu0
    %s2038 = scalar_lea.vmem [#allocation5], 112
    %2039 = vst.msk [vmem:[%s2038] sm:$0xff] %vm131, %v2030
    %2040 = vst.msk [vmem:[%s2038 + $0x8] sm:$0xff] %vm131, %v2035
    // Predicated region
    $region30: #{tpu_custom_call.1} parent=1 // pred_check
      _
    $region31: #{tpu_custom_call.1} parent=1 // pred_check_branch
      %2042 = sbr.rel (0) target = $region33
    $region32: #{tpu_custom_call.1} parent=1 // pred_region
      %s2044 = ssub.s32 2048, 2048
      %2045 = vsyncadd [#allocation4], %s2044
      %s2046 = sshll.u32 [#allocation5], 4
      %s2047 = int_to_ptr.vmem [resolvable:$true] %s2046
      %2052 = dma.vmem_to_hbm [thread:$0]  %s2047, 2048, %s6, [#allocation4], 128, 128, 8
    $region33: #{tpu_custom_call.1} parent=1 // pred_fallthru
      _
    // Predicated region
    $region34: #{tpu_custom_call.1} parent=1 // pred_check
      _
    $region35: #{tpu_custom_call.1} parent=1 // pred_check_branch
      %2054 = sbr.rel (0) target = $region37
    $region36: #{tpu_custom_call.1} parent=1 // pred_region
      %2055 = dma.done [#allocation4], 2048
    $region37: #{tpu_custom_call.1} parent=1 // pred_fallthru
      _
    %2056 = vsyncpa [#allocation3], 1
    %2057 = vsyncpa [#allocation4], 1

</llo_original>
